<compile_context>
chip_gen: v6e
topology: v6e:2x2x1
jax: 0.10.0
libtpu: 0.0.40
codegen_flags: <defaults>
</compile_context>

<pallas_src>
import numpy as np
import jax
import jax.numpy as jnp
from jax.experimental import pallas as pl
from jax.experimental.pallas import tpu as pltpu


# ---------------------------------------------------------------------------
# Host-side constant-matrix builders
# ---------------------------------------------------------------------------
def _adaptive_pool_matrix(in_size: int, out_size: int) -> np.ndarray:
    """Exact PyTorch AdaptiveAvgPool1d semantics as a (out, in) matrix."""
    m = np.zeros((out_size, in_size), dtype=np.float32)
    for i in range(out_size):
        start = (i * in_size) // out_size
        end = -((-(i + 1) * in_size) // out_size)  # ceil((i+1)*in/out)
        m[i, start:end] = 1.0 / (end - start)
    return m


def _conv_band_matrix(W: int, taps):
    """(W, W) matrix C s.t. (x @ C)[.., w] = t0*x[w-1] + t1*x[w] + t2*x[w+1]
    with zero padding at the boundaries (Conv2d kernel (1,3), padding (0,1))."""
    eye0 = jnp.eye(W, dtype=jnp.float32)
    eye_up = jnp.eye(W, k=1, dtype=jnp.float32)    # C[wi, wi+1] -> wi = wo-1  (tap 0)
    eye_dn = jnp.eye(W, k=-1, dtype=jnp.float32)   # C[wi, wi-1] -> wi = wo+1  (tap 2)
    return taps[0] * eye_up + taps[1] * eye0 + taps[2] * eye_dn


# ---------------------------------------------------------------------------
# Pallas kernel: two GEMMs + bias + ReLU on a batch tile
# ---------------------------------------------------------------------------
def _simple_cnn_kernel(bias_ref, x_ref, a_ref, k_ref, o_ref):
    # bias_ref: SMEM (1,)          conv bias
    # x_ref   : VMEM (B_tile, HW)  flattened input rows (lane-dense)
    # a_ref   : VMEM (HW, HW)      banded conv matrix  kron(I_H, C)
    # k_ref   : VMEM (HW, FO)      pooling matrix      kron(PH, PW)^T
    # o_ref   : VMEM (B_tile, FO)  flattened output (matches x.view(B, -1))
    y = jnp.dot(x_ref[...], a_ref[...],
                preferred_element_type=jnp.float32,
                precision=jax.lax.Precision.HIGHEST)
    y = jnp.maximum(y + bias_ref[0], 0.0)                      # bias + ReLU
    o_ref[...] = jnp.dot(y, k_ref[...],
                         preferred_element_type=jnp.float32,
                         precision=jax.lax.Precision.HIGHEST
                         ).astype(o_ref.dtype)


# ---------------------------------------------------------------------------
# Wrapper
# ---------------------------------------------------------------------------
def _pick_b_tile(B: int, HW: int, FO: int) -> int:
    # Budget ~24 MiB for double-buffered input+output blocks; A and K are
    # resident on top of that.  Conservative enough for v7x's 64 MiB VMEM.
    budget = 24 * 1024 * 1024
    per_row = 2 * (HW + FO) * 4
    max_rows = max(8, (budget // per_row) // 8 * 8)
    if B <= max_rows:
        return B                       # single grid step, full batch block
    return int(min(max_rows, 1024))    # multiple of 8, 512-1024 sweet spot


def simple_cnn_forward(x, conv_w, conv_b, num_features, output_size):
    """x: (B, 1, H, W) float32; conv_w: (1,1,1,3); conv_b: (1,)."""
    B, C, H, W = x.shape
    assert C == 1
    HW = H * W
    FO = num_features * output_size

    x_flat = x.reshape(B, HW).astype(jnp.float32)              # (B, HW)

    # Conv (1,3) with padding (0,1) as a block-diagonal banded matrix.
    taps = conv_w.reshape(3).astype(jnp.float32)
    Cmat = _conv_band_matrix(W, taps)                          # (W, W)
    A = jnp.kron(jnp.eye(H, dtype=jnp.float32), Cmat)          # (HW, HW)

    # Adaptive average pooling + flatten as one matrix.
    ph = _adaptive_pool_matrix(H, num_features)                # (F, H)
    pw = _adaptive_pool_matrix(W, output_size)                 # (O, W)
    K = jnp.asarray(np.kron(ph, pw).T)                         # (HW, FO)

    bias = conv_b.reshape(1).astype(jnp.float32)               # (1,) -> SMEM

    # Batch tiling (remainder handled by zero-padding the batch only).
    b_tile = _pick_b_tile(B, HW, FO)
    Bp = -(-B // b_tile) * b_tile
    if Bp != B:
        x_flat = jnp.pad(x_flat, ((0, Bp - B), (0, 0)))

    # VMEM accounting: raise scoped limit only if needed (cap < v7x physical).
    vmem_bytes = 4 * (2 * b_tile * HW + 2 * b_tile * FO + HW * HW + HW * FO)
    cp_kwargs = dict(dimension_semantics=("parallel",))
    if vmem_bytes > 32 * 1024 * 1024:
        cp_kwargs["vmem_limit_bytes"] = min(vmem_bytes + (4 << 20),
                                            48 * 1024 * 1024)

    out = pl.pallas_call(
        _simple_cnn_kernel,
        out_shape=jax.ShapeDtypeStruct((Bp, FO), jnp.float32),
        grid=(Bp // b_tile,),
        in_specs=[
            pl.BlockSpec(memory_space=pltpu.MemorySpace.SMEM),       # bias
            pl.BlockSpec((b_tile, HW), lambda i: (i, 0)),            # x rows
            pl.BlockSpec((HW, HW), lambda i: (0, 0)),                # A (resident)
            pl.BlockSpec((HW, FO), lambda i: (0, 0)),                # K (resident)
        ],
        out_specs=pl.BlockSpec((b_tile, FO), lambda i: (i, 0)),
        compiler_params=pltpu.CompilerParams(**cp_kwargs),
    )(bias, x_flat, A, K)

    return out[:B] if Bp != B else out                         # (B, F*O)


# ---------------------------------------------------------------------------
# Pure numpy reference mirroring the PyTorch forward
# ---------------------------------------------------------------------------
def _reference(x, conv_w, conv_b, num_features, output_size):
    x = np.asarray(x)
    B, _, H, W = x.shape
    w = np.asarray(conv_w).reshape(3)
    b = float(np.asarray(conv_b).reshape(()))
    xp = np.pad(x[:, 0], ((0, 0), (0, 0), (1, 1)))
    y = w[0] * xp[:, :, 0:W] + w[1] * xp[:, :, 1:W + 1] + w[2] * xp[:, :, 2:W + 2] + b
    y = np.maximum(y, 0.0)
    ph = _adaptive_pool_matrix(H, num_features)
    pw = _adaptive_pool_matrix(W, output_size)
    pooled = np.einsum("fh,bhw,ow->bfo", ph, y, pw)
    return pooled.reshape(B, -1)


if __name__ == "__main__":
    key = jax.random.PRNGKey(0)
    kx, kw, kb = jax.random.split(key, 3)

    B, H, W = 8, 16, 16
    num_features, output_size = 4, 8

    x = jax.random.normal(kx, (B, 1, H, W), dtype=jnp.float32)
    # Deterministic synthetic parameters (shapes from nn.Conv2d(1,1,(1,3)))
    conv_w = jax.random.normal(kw, (1, 1, 1, 3), dtype=jnp.float32) * 0.5
    conv_b = jax.random.normal(kb, (1,), dtype=jnp.float32) * 0.1

    out = simple_cnn_forward(x, conv_w, conv_b, num_features, output_size)
    out = jax.block_until_ready(out)

    ref = _reference(np.asarray(x), np.asarray(conv_w), np.asarray(conv_b),
                     num_features, output_size)
    np.testing.assert_allclose(np.asarray(out), ref, rtol=1e-4, atol=1e-5)

    print("KERNEL_OK")
</pallas_src>

<mosaic_0001>
module attributes {stable_mosaic.version = 11 : i64} {
  func.func @_simple_cnn_kernel(%arg0: i32, %arg1: memref<1xf32, #tpu.memory_space<smem>>, %arg2: memref<8x256xf32, #tpu.memory_space<vmem>>, %arg3: memref<256x256xf32, #tpu.memory_space<vmem>>, %arg4: memref<256x32xf32, #tpu.memory_space<vmem>>, %arg5: memref<8x32xf32, #tpu.memory_space<vmem>>) attributes {dimension_semantics = [#tpu.dimension_semantics<parallel>], iteration_bounds = array<i64: 1>, scalar_prefetch = 0 : i64, scratch_operands = 0 : i64, tpu.core_type = #tpu.core_type<tc>, window_params = [{transform_indices = @transform_0, window_bounds = array<i64: 1>}, {transform_indices = @transform_1, window_bounds = array<i64: 8, 256>}, {pipeline_mode = #tpu.pipeline_mode<synchronous>, transform_indices = @transform_2, window_bounds = array<i64: 256, 256>}, {pipeline_mode = #tpu.pipeline_mode<synchronous>, transform_indices = @transform_3, window_bounds = array<i64: 256, 32>}, {transform_indices = @transform_4, window_bounds = array<i64: 8, 32>}]} {
    %c0 = arith.constant 0 : index
    %c0_0 = arith.constant 0 : index
    %0 = vector.load %arg2[%c0, %c0_0] : memref<8x256xf32, #tpu.memory_space<vmem>>, vector<8x256xf32>
    %c0_1 = arith.constant 0 : index
    %c0_2 = arith.constant 0 : index
    %1 = vector.load %arg3[%c0_1, %c0_2] : memref<256x256xf32, #tpu.memory_space<vmem>>, vector<256x256xf32>
    %cst = arith.constant dense<0.000000e+00> : vector<8x256xf32>
    %2 = tpu.matmul %0, %1, %cst {dimension_numbers = #tpu.dot_dimension_numbers<[1], [0], [0], [1], [0, 0, 1, 1], [], []>, precision = #tpu.contract_precision<fp32>} : vector<8x256xf32>, vector<256x256xf32>, vector<8x256xf32> -> vector<8x256xf32>
    %c0_3 = arith.constant 0 : index
    %3 = memref.load %arg1[%c0_3] : memref<1xf32, #tpu.memory_space<smem>>
    %4 = vector.broadcast %3 : f32 to vector<8x256xf32>
    %5 = arith.addf %2, %4 : vector<8x256xf32>
    %cst_4 = arith.constant 0.000000e+00 : f32
    %6 = vector.broadcast %cst_4 : f32 to vector<8x256xf32>
    %7 = arith.maximumf %5, %6 : vector<8x256xf32>
    %c0_5 = arith.constant 0 : index
    %c0_6 = arith.constant 0 : index
    %8 = vector.load %arg4[%c0_5, %c0_6] : memref<256x32xf32, #tpu.memory_space<vmem>>, vector<256x32xf32>
    %cst_7 = arith.constant dense<0.000000e+00> : vector<8x32xf32>
    %9 = tpu.matmul %7, %8, %cst_7 {dimension_numbers = #tpu.dot_dimension_numbers<[1], [0], [0], [1], [0, 0, 1, 1], [], []>, precision = #tpu.contract_precision<fp32>} : vector<8x256xf32>, vector<256x32xf32>, vector<8x32xf32> -> vector<8x32xf32>
    %c0_8 = arith.constant 0 : index
    %c0_9 = arith.constant 0 : index
    %10 = vector.load %arg5[%c0_8, %c0_9] : memref<8x32xf32, #tpu.memory_space<vmem>>, vector<8x32xf32>
    tpu.vector_store %arg5[%c0_8, %c0_9], %9 {strides = array<i32>} : memref<8x32xf32, #tpu.memory_space<vmem>>, vector<8x32xf32>,
    return
  }
  func.func @transform_0(%arg0: i32) -> i32 {
    %c0_i32 = arith.constant 0 : i32
    %c0_i32_0 = arith.constant 0 : i32
    return %c0_i32 : i32
  }
  func.func @transform_1(%arg0: i32) -> (i32, i32) {
    %c0_i32 = arith.constant 0 : i32
    %c0_i32_0 = arith.constant 0 : i32
    return %arg0, %c0_i32 : i32, i32
  }
  func.func @transform_2(%arg0: i32) -> (i32, i32) {
    %c0_i32 = arith.constant 0 : i32
    %c0_i32_0 = arith.constant 0 : i32
    %c0_i32_1 = arith.constant 0 : i32
    return %c0_i32, %c0_i32_0 : i32, i32
  }
  func.func @transform_3(%arg0: i32) -> (i32, i32) {
    %c0_i32 = arith.constant 0 : i32
    %c0_i32_0 = arith.constant 0 : i32
    %c0_i32_1 = arith.constant 0 : i32
    return %c0_i32, %c0_i32_0 : i32, i32
  }
  func.func @transform_4(%arg0: i32) -> (i32, i32) {
    %c0_i32 = arith.constant 0 : i32
    %c0_i32_0 = arith.constant 0 : i32
    return %arg0, %c0_i32 : i32, i32
  }
}

</mosaic_0001>

<llo_original>
// kernel: tpu_custom_call.1
$region0: #{tpu_custom_call.1}
  #allocation0 [shape = 'u32[]', space=smem, size = 0x4, offset = 0x4, fixed_abs, tag = 'smem constant byte address 0x4 - core index']
  #allocation1 [shape = 'u32[144,128]{1,0:T(1,128)}', space=vmem, size = 0x12000, scoped, tag = 'internal scratch']
  #allocation2 [shape = 'f32[1]{0:T(128)S(6)}', space=smem, size = 0x200, scoped, tag = 'scoped memory for tpu_custom_call.1']
  %s0 = inlined_call_operand.<no memory space> [shape: f32[1], index: 0, kind: input, shape index: {}]
  %s1 = inlined_call_operand.vmem [shape: f32[8,256], index: 1, kind: input, shape index: {}]
  %s2 = inlined_call_operand.hbm [shape: f32[256,256], index: 2, kind: input, shape index: {}]
  %s3 = inlined_call_operand.vmem [shape: f32[256,32], index: 3, kind: input, shape index: {}]
  %s4 = inlined_call_operand.hbm [shape: f32[8,32], index: 4, kind: output, shape index: {}]
  %s5 = sld [smem:[#allocation0]]
  $region30: #{tpu_custom_call.1} parent=0
    _
  %s7 = ssub.s32 1, %s5
  %s8 = scalar_select 0, %s7, %s5
  %9 = sst [smem:[#allocation2]] %s0
  $region1: #{tpu_custom_call.1} parent=0
    #allocation3 [shape = 'u8[262144]{0}', space=vmem, size = 0x40000, scoped, tag = 'input window, operand 2, single buffered']
    #allocation4 [shape = 's32[1]{0}', space=sflag, size = 0x4, scoped, tag = 'scoped memory for tpu_custom_call.1']
    #allocation5 [shape = 's32[1]{0}', space=sflag, size = 0x4, scoped, tag = 'scoped memory for tpu_custom_call.1']
    #allocation6 [shape = 'u8[4096]{0}', space=vmem, size = 0x1000, scoped, tag = 'output window, operand 0, single buffered']
    %10 = vsyncpa [#allocation4], 0
    %11 = vsyncpa [#allocation5], 0
    // Predicated region
    $region2: #{tpu_custom_call.1} parent=1 // pred_check
      _
    $region3: #{tpu_custom_call.1} parent=1 // pred_check_branch
      %13 = sbr.rel (0) target = $region5
    $region4: #{tpu_custom_call.1} parent=1 // pred_region
      _
    $region5: #{tpu_custom_call.1} parent=1 // pred_fallthru
      _
    // Predicated region
    $region6: #{tpu_custom_call.1} parent=1 // pred_check
      _
    $region7: #{tpu_custom_call.1} parent=1 // pred_check_branch
      %15 = sbr.rel (0) target = $region9
    $region8: #{tpu_custom_call.1} parent=1 // pred_region
      _
    $region9: #{tpu_custom_call.1} parent=1 // pred_fallthru
      _
    // Predicated region
    $region10: #{tpu_custom_call.1} parent=1 // pred_check
      _
    $region11: #{tpu_custom_call.1} parent=1 // pred_check_branch
      %17 = sbr.rel (0) target = $region13
    $region12: #{tpu_custom_call.1} parent=1 // pred_region
      %s19 = ssub.s32 8192, 8192
      %20 = vsyncadd [#allocation4], %s19
      %s21 = sshll.u32 [#allocation3], 4
      %s22 = int_to_ptr.vmem [resolvable:$true] %s21
      %27 = dma.hbm_to_vmem [thread:$0]  %s2, 8192, %s22, [#allocation4], 256, 256, 16
    $region13: #{tpu_custom_call.1} parent=1 // pred_fallthru
      _
    // Predicated region
    $region14: #{tpu_custom_call.1} parent=1 // pred_check
      _
    $region15: #{tpu_custom_call.1} parent=1 // pred_check_branch
      %29 = sbr.rel (0) target = $region17
    $region16: #{tpu_custom_call.1} parent=1 // pred_region
      _
    $region17: #{tpu_custom_call.1} parent=1 // pred_fallthru
      _
    // Predicated region
    $region18: #{tpu_custom_call.1} parent=1 // pred_check
      _
    $region19: #{tpu_custom_call.1} parent=1 // pred_check_branch
      %31 = sbr.rel (0) target = $region21
    $region20: #{tpu_custom_call.1} parent=1 // pred_region
      %32 = dma.done [#allocation4], 8192
    $region21: #{tpu_custom_call.1} parent=1 // pred_fallthru
      _
    %v33 = vld [vmem:[%s1] sm:$0xff]
    %v34 = vld [vmem:[%s1 + $0x8] sm:$0xff]
    %v35 = vld [vmem:[#allocation3] sm:$0xff]
    %v36 = vld [vmem:[#allocation3 + $0x8] sm:$0xff]
    %v37 = vld [vmem:[#allocation3 + $0x10] sm:$0xff]
    %v38 = vld [vmem:[#allocation3 + $0x18] sm:$0xff]
    %v39 = vld [vmem:[#allocation3 + $0x20] sm:$0xff]
    %v40 = vld [vmem:[#allocation3 + $0x28] sm:$0xff]
    %v41 = vld [vmem:[#allocation3 + $0x30] sm:$0xff]
    %v42 = vld [vmem:[#allocation3 + $0x38] sm:$0xff]
    %v43 = vld [vmem:[#allocation3 + $0x40] sm:$0xff]
    %v44 = vld [vmem:[#allocation3 + $0x48] sm:$0xff]
    %v45 = vld [vmem:[#allocation3 + $0x50] sm:$0xff]
    %v46 = vld [vmem:[#allocation3 + $0x58] sm:$0xff]
    %v47 = vld [vmem:[#allocation3 + $0x60] sm:$0xff]
    %v48 = vld [vmem:[#allocation3 + $0x68] sm:$0xff]
    %v49 = vld [vmem:[#allocation3 + $0x70] sm:$0xff]
    %v50 = vld [vmem:[#allocation3 + $0x78] sm:$0xff]
    %v51 = vld [vmem:[#allocation3 + $0x80] sm:$0xff]
    %v52 = vld [vmem:[#allocation3 + $0x88] sm:$0xff]
    %v53 = vld [vmem:[#allocation3 + $0x90] sm:$0xff]
    %v54 = vld [vmem:[#allocation3 + $0x98] sm:$0xff]
    %v55 = vld [vmem:[#allocation3 + $0xa0] sm:$0xff]
    %v56 = vld [vmem:[#allocation3 + $0xa8] sm:$0xff]
    %v57 = vld [vmem:[#allocation3 + $0xb0] sm:$0xff]
    %v58 = vld [vmem:[#allocation3 + $0xb8] sm:$0xff]
    %v59 = vld [vmem:[#allocation3 + $0xc0] sm:$0xff]
    %v60 = vld [vmem:[#allocation3 + $0xc8] sm:$0xff]
    %v61 = vld [vmem:[#allocation3 + $0xd0] sm:$0xff]
    %v62 = vld [vmem:[#allocation3 + $0xd8] sm:$0xff]
    %v63 = vld [vmem:[#allocation3 + $0xe0] sm:$0xff]
    %v64 = vld [vmem:[#allocation3 + $0xe8] sm:$0xff]
    %v65 = vld [vmem:[#allocation3 + $0xf0] sm:$0xff]
    %v66 = vld [vmem:[#allocation3 + $0xf8] sm:$0xff]
    %v67 = vld [vmem:[#allocation3 + $0x100] sm:$0xff]
    %v68 = vld [vmem:[#allocation3 + $0x108] sm:$0xff]
    %v69 = vld [vmem:[#allocation3 + $0x110] sm:$0xff]
    %v70 = vld [vmem:[#allocation3 + $0x118] sm:$0xff]
    %v71 = vld [vmem:[#allocation3 + $0x120] sm:$0xff]
    %v72 = vld [vmem:[#allocation3 + $0x128] sm:$0xff]
    %v73 = vld [vmem:[#allocation3 + $0x130] sm:$0xff]
    %v74 = vld [vmem:[#allocation3 + $0x138] sm:$0xff]
    %v75 = vld [vmem:[#allocation3 + $0x140] sm:$0xff]
    %v76 = vld [vmem:[#allocation3 + $0x148] sm:$0xff]
    %v77 = vld [vmem:[#allocation3 + $0x150] sm:$0xff]
    %v78 = vld [vmem:[#allocation3 + $0x158] sm:$0xff]
    %v79 = vld [vmem:[#allocation3 + $0x160] sm:$0xff]
    %v80 = vld [vmem:[#allocation3 + $0x168] sm:$0xff]
    %v81 = vld [vmem:[#allocation3 + $0x170] sm:$0xff]
    %v82 = vld [vmem:[#allocation3 + $0x178] sm:$0xff]
    %v83 = vld [vmem:[#allocation3 + $0x180] sm:$0xff]
    %v84 = vld [vmem:[#allocation3 + $0x188] sm:$0xff]
    %v85 = vld [vmem:[#allocation3 + $0x190] sm:$0xff]
    %v86 = vld [vmem:[#allocation3 + $0x198] sm:$0xff]
    %v87 = vld [vmem:[#allocation3 + $0x1a0] sm:$0xff]
    %v88 = vld [vmem:[#allocation3 + $0x1a8] sm:$0xff]
    %v89 = vld [vmem:[#allocation3 + $0x1b0] sm:$0xff]
    %v90 = vld [vmem:[#allocation3 + $0x1b8] sm:$0xff]
    %v91 = vld [vmem:[#allocation3 + $0x1c0] sm:$0xff]
    %v92 = vld [vmem:[#allocation3 + $0x1c8] sm:$0xff]
    %v93 = vld [vmem:[#allocation3 + $0x1d0] sm:$0xff]
    %v94 = vld [vmem:[#allocation3 + $0x1d8] sm:$0xff]
    %v95 = vld [vmem:[#allocation3 + $0x1e0] sm:$0xff]
    %v96 = vld [vmem:[#allocation3 + $0x1e8] sm:$0xff]
    %v97 = vld [vmem:[#allocation3 + $0x1f0] sm:$0xff]
    %v98 = vld [vmem:[#allocation3 + $0x1f8] sm:$0xff]
    %s99 = sld [smem:[#allocation2]]
    %v100 = vstv %s99
    %v101 = vand.u32 %v66, 4294901760
    %102 = vmatprep.subr.mxu0 %v101
    %v103 = vand.u32 %v65, 4294901760
    %104 = vmatpush1.msra.mxu0 %v103
    %v105 = vand.u32 %v64, 4294901760
    %106 = vmatprep.subr.mxu0 %v105
    %v107 = vand.u32 %v63, 4294901760
    %108 = vmatpush1.msra.mxu0 %v107
    %v109 = vand.u32 %v62, 4294901760
    %110 = vmatprep.subr.mxu0 %v109
    %v111 = vand.u32 %v61, 4294901760
    %112 = vmatpush1.msra.mxu0 %v111
    %v113 = vand.u32 %v60, 4294901760
    %114 = vmatprep.subr.mxu0 %v113
    %v115 = vand.u32 %v59, 4294901760
    %116 = vmatpush1.msra.mxu0 %v115
    %v117 = vand.u32 %v58, 4294901760
    %118 = vmatprep.subr.mxu0 %v117
    %v119 = vand.u32 %v57, 4294901760
    %120 = vmatpush1.msra.mxu0 %v119
    %v121 = vand.u32 %v56, 4294901760
    %122 = vmatprep.subr.mxu0 %v121
    %v123 = vand.u32 %v55, 4294901760
    %124 = vmatpush1.msra.mxu0 %v123
    %v125 = vand.u32 %v54, 4294901760
    %126 = vmatprep.subr.mxu0 %v125
    %v127 = vand.u32 %v53, 4294901760
    %128 = vmatpush1.msra.mxu0 %v127
    %v129 = vand.u32 %v52, 4294901760
    %130 = vmatprep.subr.mxu0 %v129
    %v131 = vand.u32 %v51, 4294901760
    %132 = vmatpush1.msra.mxu0 %v131
    %v133 = vand.u32 %v50, 4294901760
    %134 = vmatprep.subr.mxu0 %v133
    %v135 = vand.u32 %v49, 4294901760
    %136 = vmatpush1.msra.mxu0 %v135
    %v137 = vand.u32 %v48, 4294901760
    %138 = vmatprep.subr.mxu0 %v137
    %v139 = vand.u32 %v47, 4294901760
    %140 = vmatpush1.msra.mxu0 %v139
    %v141 = vand.u32 %v46, 4294901760
    %142 = vmatprep.subr.mxu0 %v141
    %v143 = vand.u32 %v45, 4294901760
    %144 = vmatpush1.msra.mxu0 %v143
    %v145 = vand.u32 %v44, 4294901760
    %146 = vmatprep.subr.mxu0 %v145
    %v147 = vand.u32 %v43, 4294901760
    %148 = vmatpush1.msra.mxu0 %v147
    %v149 = vand.u32 %v42, 4294901760
    %150 = vmatprep.subr.mxu0 %v149
    %v151 = vand.u32 %v41, 4294901760
    %152 = vmatpush1.msra.mxu0 %v151
    %v153 = vand.u32 %v40, 4294901760
    %154 = vmatprep.subr.mxu0 %v153
    %v155 = vand.u32 %v39, 4294901760
    %156 = vmatpush1.msra.mxu0 %v155
    %v157 = vand.u32 %v38, 4294901760
    %158 = vmatprep.subr.mxu0 %v157
    %v159 = vand.u32 %v37, 4294901760
    %160 = vmatpush1.msra.mxu0 %v159
    %v161 = vand.u32 %v36, 4294901760
    %162 = vmatprep.subr.mxu0 %v161
    %v163 = vand.u32 %v35, 4294901760
    %164 = vmatpush1.msra.mxu0 %v163
    %v165 = vand.u32 %v98, 4294901760
    %166 = vmatprep.subr.mxu0 %v165
    %v167 = vand.u32 %v97, 4294901760
    %168 = vmatpush2.msra.mxu0 %v167
    %v169 = vand.u32 %v96, 4294901760
    %170 = vmatprep.subr.mxu0 %v169
    %v171 = vand.u32 %v95, 4294901760
    %172 = vmatpush2.msra.mxu0 %v171
    %v173 = vand.u32 %v94, 4294901760
    %174 = vmatprep.subr.mxu0 %v173
    %v175 = vand.u32 %v93, 4294901760
    %176 = vmatpush2.msra.mxu0 %v175
    %v177 = vand.u32 %v92, 4294901760
    %178 = vmatprep.subr.mxu0 %v177
    %v179 = vand.u32 %v91, 4294901760
    %180 = vmatpush2.msra.mxu0 %v179
    %v181 = vand.u32 %v90, 4294901760
    %182 = vmatprep.subr.mxu0 %v181
    %v183 = vand.u32 %v89, 4294901760
    %184 = vmatpush2.msra.mxu0 %v183
    %v185 = vand.u32 %v88, 4294901760
    %186 = vmatprep.subr.mxu0 %v185
    %v187 = vand.u32 %v87, 4294901760
    %188 = vmatpush2.msra.mxu0 %v187
    %v189 = vand.u32 %v86, 4294901760
    %190 = vmatprep.subr.mxu0 %v189
    %v191 = vand.u32 %v85, 4294901760
    %192 = vmatpush2.msra.mxu0 %v191
    %v193 = vand.u32 %v84, 4294901760
    %194 = vmatprep.subr.mxu0 %v193
    %v195 = vand.u32 %v83, 4294901760
    %196 = vmatpush2.msra.mxu0 %v195
    %v197 = vand.u32 %v82, 4294901760
    %198 = vmatprep.subr.mxu0 %v197
    %v199 = vand.u32 %v81, 4294901760
    %200 = vmatpush2.msra.mxu0 %v199
    %v201 = vand.u32 %v80, 4294901760
    %202 = vmatprep.subr.mxu0 %v201
    %v203 = vand.u32 %v79, 4294901760
    %204 = vmatpush2.msra.mxu0 %v203
    %v205 = vand.u32 %v78, 4294901760
    %206 = vmatprep.subr.mxu0 %v205
    %v207 = vand.u32 %v77, 4294901760
    %208 = vmatpush2.msra.mxu0 %v207
    %v209 = vand.u32 %v76, 4294901760
    %210 = vmatprep.subr.mxu0 %v209
    %v211 = vand.u32 %v75, 4294901760
    %212 = vmatpush2.msra.mxu0 %v211
    %v213 = vand.u32 %v74, 4294901760
    %214 = vmatprep.subr.mxu0 %v213
    %v215 = vand.u32 %v73, 4294901760
    %216 = vmatpush2.msra.mxu0 %v215
    %v217 = vand.u32 %v72, 4294901760
    %218 = vmatprep.subr.mxu0 %v217
    %v219 = vand.u32 %v71, 4294901760
    %220 = vmatpush2.msra.mxu0 %v219
    %v221 = vand.u32 %v70, 4294901760
    %222 = vmatprep.subr.mxu0 %v221
    %v223 = vand.u32 %v69, 4294901760
    %224 = vmatpush2.msra.mxu0 %v223
    %v225 = vand.u32 %v68, 4294901760
    %226 = vmatprep.subr.mxu0 %v225
    %v227 = vand.u32 %v67, 4294901760
    %228 = vmatpush2.msra.mxu0 %v227
    %v229 = vand.u32 %v34, 4294901760
    %v230 = vsub.f32 %v34, %v229
    %v231 = vand.u32 %v230, 4294901760
    %v232 = vsub.f32 %v230, %v231
    %v233 = vand.u32 %v232, 4294901760
    %234 = vmatprep.mubr.f32.mxu0 %v233
    %v235 = vand.u32 %v33, 4294901760
    %v236 = vsub.f32 %v33, %v235
    %v237 = vand.u32 %v236, 4294901760
    %v238 = vsub.f32 %v236, %v237
    %v239 = vand.u32 %v238, 4294901760
    %240 = vmatmul.mubr.f32.gmra.mxu0 %v239
    %v241 = vpop.f32.mrf.mxu0
    %v242 = vadd.f32 %v100, %v241
    %v243 = vpop.f32.mrf.mxu0
    %v244 = vadd.f32 %v100, %v243
    %245 = vdwg.mxu0
    %v246 = vand.u32 %v66, 4294901760
    %v247 = vsub.f32 %v66, %v246
    %v248 = vand.u32 %v247, 4294901760
    %v249 = vsub.f32 %v247, %v248
    %v250 = vand.u32 %v249, 4294901760
    %251 = vmatprep.subr.mxu0 %v250
    %v252 = vand.u32 %v65, 4294901760
    %v253 = vsub.f32 %v65, %v252
    %v254 = vand.u32 %v253, 4294901760
    %v255 = vsub.f32 %v253, %v254
    %v256 = vand.u32 %v255, 4294901760
    %257 = vmatpush1.msra.mxu0 %v256
    %v258 = vand.u32 %v64, 4294901760
    %v259 = vsub.f32 %v64, %v258
    %v260 = vand.u32 %v259, 4294901760
    %v261 = vsub.f32 %v259, %v260
    %v262 = vand.u32 %v261, 4294901760
    %263 = vmatprep.subr.mxu0 %v262
    %v264 = vand.u32 %v63, 4294901760
    %v265 = vsub.f32 %v63, %v264
    %v266 = vand.u32 %v265, 4294901760
    %v267 = vsub.f32 %v265, %v266
    %v268 = vand.u32 %v267, 4294901760
    %269 = vmatpush1.msra.mxu0 %v268
    %v270 = vand.u32 %v62, 4294901760
    %v271 = vsub.f32 %v62, %v270
    %v272 = vand.u32 %v271, 4294901760
    %v273 = vsub.f32 %v271, %v272
    %v274 = vand.u32 %v273, 4294901760
    %275 = vmatprep.subr.mxu0 %v274
    %v276 = vand.u32 %v61, 4294901760
    %v277 = vsub.f32 %v61, %v276
    %v278 = vand.u32 %v277, 4294901760
    %v279 = vsub.f32 %v277, %v278
    %v280 = vand.u32 %v279, 4294901760
    %281 = vmatpush1.msra.mxu0 %v280
    %v282 = vand.u32 %v60, 4294901760
    %v283 = vsub.f32 %v60, %v282
    %v284 = vand.u32 %v283, 4294901760
    %v285 = vsub.f32 %v283, %v284
    %v286 = vand.u32 %v285, 4294901760
    %287 = vmatprep.subr.mxu0 %v286
    %v288 = vand.u32 %v59, 4294901760
    %v289 = vsub.f32 %v59, %v288
    %v290 = vand.u32 %v289, 4294901760
    %v291 = vsub.f32 %v289, %v290
    %v292 = vand.u32 %v291, 4294901760
    %293 = vmatpush1.msra.mxu0 %v292
    %v294 = vand.u32 %v58, 4294901760
    %v295 = vsub.f32 %v58, %v294
    %v296 = vand.u32 %v295, 4294901760
    %v297 = vsub.f32 %v295, %v296
    %v298 = vand.u32 %v297, 4294901760
    %299 = vmatprep.subr.mxu0 %v298
    %v300 = vand.u32 %v57, 4294901760
    %v301 = vsub.f32 %v57, %v300
    %v302 = vand.u32 %v301, 4294901760
    %v303 = vsub.f32 %v301, %v302
    %v304 = vand.u32 %v303, 4294901760
    %305 = vmatpush1.msra.mxu0 %v304
    %v306 = vand.u32 %v56, 4294901760
    %v307 = vsub.f32 %v56, %v306
    %v308 = vand.u32 %v307, 4294901760
    %v309 = vsub.f32 %v307, %v308
    %v310 = vand.u32 %v309, 4294901760
    %311 = vmatprep.subr.mxu0 %v310
    %v312 = vand.u32 %v55, 4294901760
    %v313 = vsub.f32 %v55, %v312
    %v314 = vand.u32 %v313, 4294901760
    %v315 = vsub.f32 %v313, %v314
    %v316 = vand.u32 %v315, 4294901760
    %317 = vmatpush1.msra.mxu0 %v316
    %v318 = vand.u32 %v54, 4294901760
    %v319 = vsub.f32 %v54, %v318
    %v320 = vand.u32 %v319, 4294901760
    %v321 = vsub.f32 %v319, %v320
    %v322 = vand.u32 %v321, 4294901760
    %323 = vmatprep.subr.mxu0 %v322
    %v324 = vand.u32 %v53, 4294901760
    %v325 = vsub.f32 %v53, %v324
    %v326 = vand.u32 %v325, 4294901760
    %v327 = vsub.f32 %v325, %v326
    %v328 = vand.u32 %v327, 4294901760
    %329 = vmatpush1.msra.mxu0 %v328
    %v330 = vand.u32 %v52, 4294901760
    %v331 = vsub.f32 %v52, %v330
    %v332 = vand.u32 %v331, 4294901760
    %v333 = vsub.f32 %v331, %v332
    %v334 = vand.u32 %v333, 4294901760
    %335 = vmatprep.subr.mxu0 %v334
    %v336 = vand.u32 %v51, 4294901760
    %v337 = vsub.f32 %v51, %v336
    %v338 = vand.u32 %v337, 4294901760
    %v339 = vsub.f32 %v337, %v338
    %v340 = vand.u32 %v339, 4294901760
    %341 = vmatpush1.msra.mxu0 %v340
    %v342 = vand.u32 %v50, 4294901760
    %v343 = vsub.f32 %v50, %v342
    %v344 = vand.u32 %v343, 4294901760
    %v345 = vsub.f32 %v343, %v344
    %v346 = vand.u32 %v345, 4294901760
    %347 = vmatprep.subr.mxu0 %v346
    %v348 = vand.u32 %v49, 4294901760
    %v349 = vsub.f32 %v49, %v348
    %v350 = vand.u32 %v349, 4294901760
    %v351 = vsub.f32 %v349, %v350
    %v352 = vand.u32 %v351, 4294901760
    %353 = vmatpush1.msra.mxu0 %v352
    %v354 = vand.u32 %v48, 4294901760
    %v355 = vsub.f32 %v48, %v354
    %v356 = vand.u32 %v355, 4294901760
    %v357 = vsub.f32 %v355, %v356
    %v358 = vand.u32 %v357, 4294901760
    %359 = vmatprep.subr.mxu0 %v358
    %v360 = vand.u32 %v47, 4294901760
    %v361 = vsub.f32 %v47, %v360
    %v362 = vand.u32 %v361, 4294901760
    %v363 = vsub.f32 %v361, %v362
    %v364 = vand.u32 %v363, 4294901760
    %365 = vmatpush1.msra.mxu0 %v364
    %v366 = vand.u32 %v46, 4294901760
    %v367 = vsub.f32 %v46, %v366
    %v368 = vand.u32 %v367, 4294901760
    %v369 = vsub.f32 %v367, %v368
    %v370 = vand.u32 %v369, 4294901760
    %371 = vmatprep.subr.mxu0 %v370
    %v372 = vand.u32 %v45, 4294901760
    %v373 = vsub.f32 %v45, %v372
    %v374 = vand.u32 %v373, 4294901760
    %v375 = vsub.f32 %v373, %v374
    %v376 = vand.u32 %v375, 4294901760
    %377 = vmatpush1.msra.mxu0 %v376
    %v378 = vand.u32 %v44, 4294901760
    %v379 = vsub.f32 %v44, %v378
    %v380 = vand.u32 %v379, 4294901760
    %v381 = vsub.f32 %v379, %v380
    %v382 = vand.u32 %v381, 4294901760
    %383 = vmatprep.subr.mxu0 %v382
    %v384 = vand.u32 %v43, 4294901760
    %v385 = vsub.f32 %v43, %v384
    %v386 = vand.u32 %v385, 4294901760
    %v387 = vsub.f32 %v385, %v386
    %v388 = vand.u32 %v387, 4294901760
    %389 = vmatpush1.msra.mxu0 %v388
    %v390 = vand.u32 %v42, 4294901760
    %v391 = vsub.f32 %v42, %v390
    %v392 = vand.u32 %v391, 4294901760
    %v393 = vsub.f32 %v391, %v392
    %v394 = vand.u32 %v393, 4294901760
    %395 = vmatprep.subr.mxu0 %v394
    %v396 = vand.u32 %v41, 4294901760
    %v397 = vsub.f32 %v41, %v396
    %v398 = vand.u32 %v397, 4294901760
    %v399 = vsub.f32 %v397, %v398
    %v400 = vand.u32 %v399, 4294901760
    %401 = vmatpush1.msra.mxu0 %v400
    %v402 = vand.u32 %v40, 4294901760
    %v403 = vsub.f32 %v40, %v402
    %v404 = vand.u32 %v403, 4294901760
    %v405 = vsub.f32 %v403, %v404
    %v406 = vand.u32 %v405, 4294901760
    %407 = vmatprep.subr.mxu0 %v406
    %v408 = vand.u32 %v39, 4294901760
    %v409 = vsub.f32 %v39, %v408
    %v410 = vand.u32 %v409, 4294901760
    %v411 = vsub.f32 %v409, %v410
    %v412 = vand.u32 %v411, 4294901760
    %413 = vmatpush1.msra.mxu0 %v412
    %v414 = vand.u32 %v38, 4294901760
    %v415 = vsub.f32 %v38, %v414
    %v416 = vand.u32 %v415, 4294901760
    %v417 = vsub.f32 %v415, %v416
    %v418 = vand.u32 %v417, 4294901760
    %419 = vmatprep.subr.mxu0 %v418
    %v420 = vand.u32 %v37, 4294901760
    %v421 = vsub.f32 %v37, %v420
    %v422 = vand.u32 %v421, 4294901760
    %v423 = vsub.f32 %v421, %v422
    %v424 = vand.u32 %v423, 4294901760
    %425 = vmatpush1.msra.mxu0 %v424
    %v426 = vand.u32 %v36, 4294901760
    %v427 = vsub.f32 %v36, %v426
    %v428 = vand.u32 %v427, 4294901760
    %v429 = vsub.f32 %v427, %v428
    %v430 = vand.u32 %v429, 4294901760
    %431 = vmatprep.subr.mxu0 %v430
    %v432 = vand.u32 %v35, 4294901760
    %v433 = vsub.f32 %v35, %v432
    %v434 = vand.u32 %v433, 4294901760
    %v435 = vsub.f32 %v433, %v434
    %v436 = vand.u32 %v435, 4294901760
    %437 = vmatpush1.msra.mxu0 %v436
    %v438 = vand.u32 %v98, 4294901760
    %v439 = vsub.f32 %v98, %v438
    %v440 = vand.u32 %v439, 4294901760
    %v441 = vsub.f32 %v439, %v440
    %v442 = vand.u32 %v441, 4294901760
    %443 = vmatprep.subr.mxu0 %v442
    %v444 = vand.u32 %v97, 4294901760
    %v445 = vsub.f32 %v97, %v444
    %v446 = vand.u32 %v445, 4294901760
    %v447 = vsub.f32 %v445, %v446
    %v448 = vand.u32 %v447, 4294901760
    %449 = vmatpush2.msra.mxu0 %v448
    %v450 = vand.u32 %v96, 4294901760
    %v451 = vsub.f32 %v96, %v450
    %v452 = vand.u32 %v451, 4294901760
    %v453 = vsub.f32 %v451, %v452
    %v454 = vand.u32 %v453, 4294901760
    %455 = vmatprep.subr.mxu0 %v454
    %v456 = vand.u32 %v95, 4294901760
    %v457 = vsub.f32 %v95, %v456
    %v458 = vand.u32 %v457, 4294901760
    %v459 = vsub.f32 %v457, %v458
    %v460 = vand.u32 %v459, 4294901760
    %461 = vmatpush2.msra.mxu0 %v460
    %v462 = vand.u32 %v94, 4294901760
    %v463 = vsub.f32 %v94, %v462
    %v464 = vand.u32 %v463, 4294901760
    %v465 = vsub.f32 %v463, %v464
    %v466 = vand.u32 %v465, 4294901760
    %467 = vmatprep.subr.mxu0 %v466
    %v468 = vand.u32 %v93, 4294901760
    %v469 = vsub.f32 %v93, %v468
    %v470 = vand.u32 %v469, 4294901760
    %v471 = vsub.f32 %v469, %v470
    %v472 = vand.u32 %v471, 4294901760
    %473 = vmatpush2.msra.mxu0 %v472
    %v474 = vand.u32 %v92, 4294901760
    %v475 = vsub.f32 %v92, %v474
    %v476 = vand.u32 %v475, 4294901760
    %v477 = vsub.f32 %v475, %v476
    %v478 = vand.u32 %v477, 4294901760
    %479 = vmatprep.subr.mxu0 %v478
    %v480 = vand.u32 %v91, 4294901760
    %v481 = vsub.f32 %v91, %v480
    %v482 = vand.u32 %v481, 4294901760
    %v483 = vsub.f32 %v481, %v482
    %v484 = vand.u32 %v483, 4294901760
    %485 = vmatpush2.msra.mxu0 %v484
    %v486 = vand.u32 %v90, 4294901760
    %v487 = vsub.f32 %v90, %v486
    %v488 = vand.u32 %v487, 4294901760
    %v489 = vsub.f32 %v487, %v488
    %v490 = vand.u32 %v489, 4294901760
    %491 = vmatprep.subr.mxu0 %v490
    %v492 = vand.u32 %v89, 4294901760
    %v493 = vsub.f32 %v89, %v492
    %v494 = vand.u32 %v493, 4294901760
    %v495 = vsub.f32 %v493, %v494
    %v496 = vand.u32 %v495, 4294901760
    %497 = vmatpush2.msra.mxu0 %v496
    %v498 = vand.u32 %v88, 4294901760
    %v499 = vsub.f32 %v88, %v498
    %v500 = vand.u32 %v499, 4294901760
    %v501 = vsub.f32 %v499, %v500
    %v502 = vand.u32 %v501, 4294901760
    %503 = vmatprep.subr.mxu0 %v502
    %v504 = vand.u32 %v87, 4294901760
    %v505 = vsub.f32 %v87, %v504
    %v506 = vand.u32 %v505, 4294901760
    %v507 = vsub.f32 %v505, %v506
    %v508 = vand.u32 %v507, 4294901760
    %509 = vmatpush2.msra.mxu0 %v508
    %v510 = vand.u32 %v86, 4294901760
    %v511 = vsub.f32 %v86, %v510
    %v512 = vand.u32 %v511, 4294901760
    %v513 = vsub.f32 %v511, %v512
    %v514 = vand.u32 %v513, 4294901760
    %515 = vmatprep.subr.mxu0 %v514
    %v516 = vand.u32 %v85, 4294901760
    %v517 = vsub.f32 %v85, %v516
    %v518 = vand.u32 %v517, 4294901760
    %v519 = vsub.f32 %v517, %v518
    %v520 = vand.u32 %v519, 4294901760
    %521 = vmatpush2.msra.mxu0 %v520
    %v522 = vand.u32 %v84, 4294901760
    %v523 = vsub.f32 %v84, %v522
    %v524 = vand.u32 %v523, 4294901760
    %v525 = vsub.f32 %v523, %v524
    %v526 = vand.u32 %v525, 4294901760
    %527 = vmatprep.subr.mxu0 %v526
    %v528 = vand.u32 %v83, 4294901760
    %v529 = vsub.f32 %v83, %v528
    %v530 = vand.u32 %v529, 4294901760
    %v531 = vsub.f32 %v529, %v530
    %v532 = vand.u32 %v531, 4294901760
    %533 = vmatpush2.msra.mxu0 %v532
    %v534 = vand.u32 %v82, 4294901760
    %v535 = vsub.f32 %v82, %v534
    %v536 = vand.u32 %v535, 4294901760
    %v537 = vsub.f32 %v535, %v536
    %v538 = vand.u32 %v537, 4294901760
    %539 = vmatprep.subr.mxu0 %v538
    %v540 = vand.u32 %v81, 4294901760
    %v541 = vsub.f32 %v81, %v540
    %v542 = vand.u32 %v541, 4294901760
    %v543 = vsub.f32 %v541, %v542
    %v544 = vand.u32 %v543, 4294901760
    %545 = vmatpush2.msra.mxu0 %v544
    %v546 = vand.u32 %v80, 4294901760
    %v547 = vsub.f32 %v80, %v546
    %v548 = vand.u32 %v547, 4294901760
    %v549 = vsub.f32 %v547, %v548
    %v550 = vand.u32 %v549, 4294901760
    %551 = vmatprep.subr.mxu0 %v550
    %v552 = vand.u32 %v79, 4294901760
    %v553 = vsub.f32 %v79, %v552
    %v554 = vand.u32 %v553, 4294901760
    %v555 = vsub.f32 %v553, %v554
    %v556 = vand.u32 %v555, 4294901760
    %557 = vmatpush2.msra.mxu0 %v556
    %v558 = vand.u32 %v78, 4294901760
    %v559 = vsub.f32 %v78, %v558
    %v560 = vand.u32 %v559, 4294901760
    %v561 = vsub.f32 %v559, %v560
    %v562 = vand.u32 %v561, 4294901760
    %563 = vmatprep.subr.mxu0 %v562
    %v564 = vand.u32 %v77, 4294901760
    %v565 = vsub.f32 %v77, %v564
    %v566 = vand.u32 %v565, 4294901760
    %v567 = vsub.f32 %v565, %v566
    %v568 = vand.u32 %v567, 4294901760
    %569 = vmatpush2.msra.mxu0 %v568
    %v570 = vand.u32 %v76, 4294901760
    %v571 = vsub.f32 %v76, %v570
    %v572 = vand.u32 %v571, 4294901760
    %v573 = vsub.f32 %v571, %v572
    %v574 = vand.u32 %v573, 4294901760
    %575 = vmatprep.subr.mxu0 %v574
    %v576 = vand.u32 %v75, 4294901760
    %v577 = vsub.f32 %v75, %v576
    %v578 = vand.u32 %v577, 4294901760
    %v579 = vsub.f32 %v577, %v578
    %v580 = vand.u32 %v579, 4294901760
    %581 = vmatpush2.msra.mxu0 %v580
    %v582 = vand.u32 %v74, 4294901760
    %v583 = vsub.f32 %v74, %v582
    %v584 = vand.u32 %v583, 4294901760
    %v585 = vsub.f32 %v583, %v584
    %v586 = vand.u32 %v585, 4294901760
    %587 = vmatprep.subr.mxu0 %v586
    %v588 = vand.u32 %v73, 4294901760
    %v589 = vsub.f32 %v73, %v588
    %v590 = vand.u32 %v589, 4294901760
    %v591 = vsub.f32 %v589, %v590
    %v592 = vand.u32 %v591, 4294901760
    %593 = vmatpush2.msra.mxu0 %v592
    %v594 = vand.u32 %v72, 4294901760
    %v595 = vsub.f32 %v72, %v594
    %v596 = vand.u32 %v595, 4294901760
    %v597 = vsub.f32 %v595, %v596
    %v598 = vand.u32 %v597, 4294901760
    %599 = vmatprep.subr.mxu0 %v598
    %v600 = vand.u32 %v71, 4294901760
    %v601 = vsub.f32 %v71, %v600
    %v602 = vand.u32 %v601, 4294901760
    %v603 = vsub.f32 %v601, %v602
    %v604 = vand.u32 %v603, 4294901760
    %605 = vmatpush2.msra.mxu0 %v604
    %v606 = vand.u32 %v70, 4294901760
    %v607 = vsub.f32 %v70, %v606
    %v608 = vand.u32 %v607, 4294901760
    %v609 = vsub.f32 %v607, %v608
    %v610 = vand.u32 %v609, 4294901760
    %611 = vmatprep.subr.mxu0 %v610
    %v612 = vand.u32 %v69, 4294901760
    %v613 = vsub.f32 %v69, %v612
    %v614 = vand.u32 %v613, 4294901760
    %v615 = vsub.f32 %v613, %v614
    %v616 = vand.u32 %v615, 4294901760
    %617 = vmatpush2.msra.mxu0 %v616
    %v618 = vand.u32 %v68, 4294901760
    %v619 = vsub.f32 %v68, %v618
    %v620 = vand.u32 %v619, 4294901760
    %v621 = vsub.f32 %v619, %v620
    %v622 = vand.u32 %v621, 4294901760
    %623 = vmatprep.subr.mxu0 %v622
    %v624 = vand.u32 %v67, 4294901760
    %v625 = vsub.f32 %v67, %v624
    %v626 = vand.u32 %v625, 4294901760
    %v627 = vsub.f32 %v625, %v626
    %v628 = vand.u32 %v627, 4294901760
    %629 = vmatpush2.msra.mxu0 %v628
    %v630 = vand.u32 %v34, 4294901760
    %631 = vmatprep.mubr.f32.mxu0 %v630
    %v632 = vand.u32 %v33, 4294901760
    %633 = vmatmul.mubr.f32.gmra.mxu0 %v632
    %v634 = vpop.f32.mrf.mxu0
    %v635 = vadd.f32 %v242, %v634
    %v636 = vpop.f32.mrf.mxu0
    %v637 = vadd.f32 %v244, %v636
    %638 = vdwg.mxu0
    %v639 = vand.u32 %v66, 4294901760
    %v640 = vsub.f32 %v66, %v639
    %641 = vmatprep.subr.mxu0 %v640
    %v642 = vand.u32 %v65, 4294901760
    %v643 = vsub.f32 %v65, %v642
    %644 = vmatpush1.msra.mxu0 %v643
    %v645 = vand.u32 %v64, 4294901760
    %v646 = vsub.f32 %v64, %v645
    %647 = vmatprep.subr.mxu0 %v646
    %v648 = vand.u32 %v63, 4294901760
    %v649 = vsub.f32 %v63, %v648
    %650 = vmatpush1.msra.mxu0 %v649
    %v651 = vand.u32 %v62, 4294901760
    %v652 = vsub.f32 %v62, %v651
    %653 = vmatprep.subr.mxu0 %v652
    %v654 = vand.u32 %v61, 4294901760
    %v655 = vsub.f32 %v61, %v654
    %656 = vmatpush1.msra.mxu0 %v655
    %v657 = vand.u32 %v60, 4294901760
    %v658 = vsub.f32 %v60, %v657
    %659 = vmatprep.subr.mxu0 %v658
    %v660 = vand.u32 %v59, 4294901760
    %v661 = vsub.f32 %v59, %v660
    %662 = vmatpush1.msra.mxu0 %v661
    %v663 = vand.u32 %v58, 4294901760
    %v664 = vsub.f32 %v58, %v663
    %665 = vmatprep.subr.mxu0 %v664
    %v666 = vand.u32 %v57, 4294901760
    %v667 = vsub.f32 %v57, %v666
    %668 = vmatpush1.msra.mxu0 %v667
    %v669 = vand.u32 %v56, 4294901760
    %v670 = vsub.f32 %v56, %v669
    %671 = vmatprep.subr.mxu0 %v670
    %v672 = vand.u32 %v55, 4294901760
    %v673 = vsub.f32 %v55, %v672
    %674 = vmatpush1.msra.mxu0 %v673
    %v675 = vand.u32 %v54, 4294901760
    %v676 = vsub.f32 %v54, %v675
    %677 = vmatprep.subr.mxu0 %v676
    %v678 = vand.u32 %v53, 4294901760
    %v679 = vsub.f32 %v53, %v678
    %680 = vmatpush1.msra.mxu0 %v679
    %v681 = vand.u32 %v52, 4294901760
    %v682 = vsub.f32 %v52, %v681
    %683 = vmatprep.subr.mxu0 %v682
    %v684 = vand.u32 %v51, 4294901760
    %v685 = vsub.f32 %v51, %v684
    %686 = vmatpush1.msra.mxu0 %v685
    %v687 = vand.u32 %v50, 4294901760
    %v688 = vsub.f32 %v50, %v687
    %689 = vmatprep.subr.mxu0 %v688
    %v690 = vand.u32 %v49, 4294901760
    %v691 = vsub.f32 %v49, %v690
    %692 = vmatpush1.msra.mxu0 %v691
    %v693 = vand.u32 %v48, 4294901760
    %v694 = vsub.f32 %v48, %v693
    %695 = vmatprep.subr.mxu0 %v694
    %v696 = vand.u32 %v47, 4294901760
    %v697 = vsub.f32 %v47, %v696
    %698 = vmatpush1.msra.mxu0 %v697
    %v699 = vand.u32 %v46, 4294901760
    %v700 = vsub.f32 %v46, %v699
    %701 = vmatprep.subr.mxu0 %v700
    %v702 = vand.u32 %v45, 4294901760
    %v703 = vsub.f32 %v45, %v702
    %704 = vmatpush1.msra.mxu0 %v703
    %v705 = vand.u32 %v44, 4294901760
    %v706 = vsub.f32 %v44, %v705
    %707 = vmatprep.subr.mxu0 %v706
    %v708 = vand.u32 %v43, 4294901760
    %v709 = vsub.f32 %v43, %v708
    %710 = vmatpush1.msra.mxu0 %v709
    %v711 = vand.u32 %v42, 4294901760
    %v712 = vsub.f32 %v42, %v711
    %713 = vmatprep.subr.mxu0 %v712
    %v714 = vand.u32 %v41, 4294901760
    %v715 = vsub.f32 %v41, %v714
    %716 = vmatpush1.msra.mxu0 %v715
    %v717 = vand.u32 %v40, 4294901760
    %v718 = vsub.f32 %v40, %v717
    %719 = vmatprep.subr.mxu0 %v718
    %v720 = vand.u32 %v39, 4294901760
    %v721 = vsub.f32 %v39, %v720
    %722 = vmatpush1.msra.mxu0 %v721
    %v723 = vand.u32 %v38, 4294901760
    %v724 = vsub.f32 %v38, %v723
    %725 = vmatprep.subr.mxu0 %v724
    %v726 = vand.u32 %v37, 4294901760
    %v727 = vsub.f32 %v37, %v726
    %728 = vmatpush1.msra.mxu0 %v727
    %v729 = vand.u32 %v36, 4294901760
    %v730 = vsub.f32 %v36, %v729
    %731 = vmatprep.subr.mxu0 %v730
    %v732 = vand.u32 %v35, 4294901760
    %v733 = vsub.f32 %v35, %v732
    %734 = vmatpush1.msra.mxu0 %v733
    %v735 = vand.u32 %v98, 4294901760
    %v736 = vsub.f32 %v98, %v735
    %737 = vmatprep.subr.mxu0 %v736
    %v738 = vand.u32 %v97, 4294901760
    %v739 = vsub.f32 %v97, %v738
    %740 = vmatpush2.msra.mxu0 %v739
    %v741 = vand.u32 %v96, 4294901760
    %v742 = vsub.f32 %v96, %v741
    %743 = vmatprep.subr.mxu0 %v742
    %v744 = vand.u32 %v95, 4294901760
    %v745 = vsub.f32 %v95, %v744
    %746 = vmatpush2.msra.mxu0 %v745
    %v747 = vand.u32 %v94, 4294901760
    %v748 = vsub.f32 %v94, %v747
    %749 = vmatprep.subr.mxu0 %v748
    %v750 = vand.u32 %v93, 4294901760
    %v751 = vsub.f32 %v93, %v750
    %752 = vmatpush2.msra.mxu0 %v751
    %v753 = vand.u32 %v92, 4294901760
    %v754 = vsub.f32 %v92, %v753
    %755 = vmatprep.subr.mxu0 %v754
    %v756 = vand.u32 %v91, 4294901760
    %v757 = vsub.f32 %v91, %v756
    %758 = vmatpush2.msra.mxu0 %v757
    %v759 = vand.u32 %v90, 4294901760
    %v760 = vsub.f32 %v90, %v759
    %761 = vmatprep.subr.mxu0 %v760
    %v762 = vand.u32 %v89, 4294901760
    %v763 = vsub.f32 %v89, %v762
    %764 = vmatpush2.msra.mxu0 %v763
    %v765 = vand.u32 %v88, 4294901760
    %v766 = vsub.f32 %v88, %v765
    %767 = vmatprep.subr.mxu0 %v766
    %v768 = vand.u32 %v87, 4294901760
    %v769 = vsub.f32 %v87, %v768
    %770 = vmatpush2.msra.mxu0 %v769
    %v771 = vand.u32 %v86, 4294901760
    %v772 = vsub.f32 %v86, %v771
    %773 = vmatprep.subr.mxu0 %v772
    %v774 = vand.u32 %v85, 4294901760
    %v775 = vsub.f32 %v85, %v774
    %776 = vmatpush2.msra.mxu0 %v775
    %v777 = vand.u32 %v84, 4294901760
    %v778 = vsub.f32 %v84, %v777
    %779 = vmatprep.subr.mxu0 %v778
    %v780 = vand.u32 %v83, 4294901760
    %v781 = vsub.f32 %v83, %v780
    %782 = vmatpush2.msra.mxu0 %v781
    %v783 = vand.u32 %v82, 4294901760
    %v784 = vsub.f32 %v82, %v783
    %785 = vmatprep.subr.mxu0 %v784
    %v786 = vand.u32 %v81, 4294901760
    %v787 = vsub.f32 %v81, %v786
    %788 = vmatpush2.msra.mxu0 %v787
    %v789 = vand.u32 %v80, 4294901760
    %v790 = vsub.f32 %v80, %v789
    %791 = vmatprep.subr.mxu0 %v790
    %v792 = vand.u32 %v79, 4294901760
    %v793 = vsub.f32 %v79, %v792
    %794 = vmatpush2.msra.mxu0 %v793
    %v795 = vand.u32 %v78, 4294901760
    %v796 = vsub.f32 %v78, %v795
    %797 = vmatprep.subr.mxu0 %v796
    %v798 = vand.u32 %v77, 4294901760
    %v799 = vsub.f32 %v77, %v798
    %800 = vmatpush2.msra.mxu0 %v799
    %v801 = vand.u32 %v76, 4294901760
    %v802 = vsub.f32 %v76, %v801
    %803 = vmatprep.subr.mxu0 %v802
    %v804 = vand.u32 %v75, 4294901760
    %v805 = vsub.f32 %v75, %v804
    %806 = vmatpush2.msra.mxu0 %v805
    %v807 = vand.u32 %v74, 4294901760
    %v808 = vsub.f32 %v74, %v807
    %809 = vmatprep.subr.mxu0 %v808
    %v810 = vand.u32 %v73, 4294901760
    %v811 = vsub.f32 %v73, %v810
    %812 = vmatpush2.msra.mxu0 %v811
    %v813 = vand.u32 %v72, 4294901760
    %v814 = vsub.f32 %v72, %v813
    %815 = vmatprep.subr.mxu0 %v814
    %v816 = vand.u32 %v71, 4294901760
    %v817 = vsub.f32 %v71, %v816
    %818 = vmatpush2.msra.mxu0 %v817
    %v819 = vand.u32 %v70, 4294901760
    %v820 = vsub.f32 %v70, %v819
    %821 = vmatprep.subr.mxu0 %v820
    %v822 = vand.u32 %v69, 4294901760
    %v823 = vsub.f32 %v69, %v822
    %824 = vmatpush2.msra.mxu0 %v823
    %v825 = vand.u32 %v68, 4294901760
    %v826 = vsub.f32 %v68, %v825
    %827 = vmatprep.subr.mxu0 %v826
    %v828 = vand.u32 %v67, 4294901760
    %v829 = vsub.f32 %v67, %v828
    %830 = vmatpush2.msra.mxu0 %v829
    %v831 = vand.u32 %v34, 4294901760
    %v832 = vsub.f32 %v34, %v831
    %833 = vmatprep.mubr.f32.mxu0 %v832
    %v834 = vand.u32 %v33, 4294901760
    %v835 = vsub.f32 %v33, %v834
    %836 = vmatmul.mubr.f32.gmra.mxu0 %v835
    %v837 = vpop.f32.mrf.mxu0
    %v838 = vadd.f32 %v635, %v837
    %v839 = vpop.f32.mrf.mxu0
    %v840 = vadd.f32 %v637, %v839
    %841 = vdwg.mxu0
    %v842 = vand.u32 %v66, 4294901760
    %843 = vmatprep.subr.mxu0 %v842
    %v844 = vand.u32 %v65, 4294901760
    %845 = vmatpush1.msra.mxu0 %v844
    %v846 = vand.u32 %v64, 4294901760
    %847 = vmatprep.subr.mxu0 %v846
    %v848 = vand.u32 %v63, 4294901760
    %849 = vmatpush1.msra.mxu0 %v848
    %v850 = vand.u32 %v62, 4294901760
    %851 = vmatprep.subr.mxu0 %v850
    %v852 = vand.u32 %v61, 4294901760
    %853 = vmatpush1.msra.mxu0 %v852
    %v854 = vand.u32 %v60, 4294901760
    %855 = vmatprep.subr.mxu0 %v854
    %v856 = vand.u32 %v59, 4294901760
    %857 = vmatpush1.msra.mxu0 %v856
    %v858 = vand.u32 %v58, 4294901760
    %859 = vmatprep.subr.mxu0 %v858
    %v860 = vand.u32 %v57, 4294901760
    %861 = vmatpush1.msra.mxu0 %v860
    %v862 = vand.u32 %v56, 4294901760
    %863 = vmatprep.subr.mxu0 %v862
    %v864 = vand.u32 %v55, 4294901760
    %865 = vmatpush1.msra.mxu0 %v864
    %v866 = vand.u32 %v54, 4294901760
    %867 = vmatprep.subr.mxu0 %v866
    %v868 = vand.u32 %v53, 4294901760
    %869 = vmatpush1.msra.mxu0 %v868
    %v870 = vand.u32 %v52, 4294901760
    %871 = vmatprep.subr.mxu0 %v870
    %v872 = vand.u32 %v51, 4294901760
    %873 = vmatpush1.msra.mxu0 %v872
    %v874 = vand.u32 %v50, 4294901760
    %875 = vmatprep.subr.mxu0 %v874
    %v876 = vand.u32 %v49, 4294901760
    %877 = vmatpush1.msra.mxu0 %v876
    %v878 = vand.u32 %v48, 4294901760
    %879 = vmatprep.subr.mxu0 %v878
    %v880 = vand.u32 %v47, 4294901760
    %881 = vmatpush1.msra.mxu0 %v880
    %v882 = vand.u32 %v46, 4294901760
    %883 = vmatprep.subr.mxu0 %v882
    %v884 = vand.u32 %v45, 4294901760
    %885 = vmatpush1.msra.mxu0 %v884
    %v886 = vand.u32 %v44, 4294901760
    %887 = vmatprep.subr.mxu0 %v886
    %v888 = vand.u32 %v43, 4294901760
    %889 = vmatpush1.msra.mxu0 %v888
    %v890 = vand.u32 %v42, 4294901760
    %891 = vmatprep.subr.mxu0 %v890
    %v892 = vand.u32 %v41, 4294901760
    %893 = vmatpush1.msra.mxu0 %v892
    %v894 = vand.u32 %v40, 4294901760
    %895 = vmatprep.subr.mxu0 %v894
    %v896 = vand.u32 %v39, 4294901760
    %897 = vmatpush1.msra.mxu0 %v896
    %v898 = vand.u32 %v38, 4294901760
    %899 = vmatprep.subr.mxu0 %v898
    %v900 = vand.u32 %v37, 4294901760
    %901 = vmatpush1.msra.mxu0 %v900
    %v902 = vand.u32 %v36, 4294901760
    %903 = vmatprep.subr.mxu0 %v902
    %v904 = vand.u32 %v35, 4294901760
    %905 = vmatpush1.msra.mxu0 %v904
    %v906 = vand.u32 %v98, 4294901760
    %907 = vmatprep.subr.mxu0 %v906
    %v908 = vand.u32 %v97, 4294901760
    %909 = vmatpush2.msra.mxu0 %v908
    %v910 = vand.u32 %v96, 4294901760
    %911 = vmatprep.subr.mxu0 %v910
    %v912 = vand.u32 %v95, 4294901760
    %913 = vmatpush2.msra.mxu0 %v912
    %v914 = vand.u32 %v94, 4294901760
    %915 = vmatprep.subr.mxu0 %v914
    %v916 = vand.u32 %v93, 4294901760
    %917 = vmatpush2.msra.mxu0 %v916
    %v918 = vand.u32 %v92, 4294901760
    %919 = vmatprep.subr.mxu0 %v918
    %v920 = vand.u32 %v91, 4294901760
    %921 = vmatpush2.msra.mxu0 %v920
    %v922 = vand.u32 %v90, 4294901760
    %923 = vmatprep.subr.mxu0 %v922
    %v924 = vand.u32 %v89, 4294901760
    %925 = vmatpush2.msra.mxu0 %v924
    %v926 = vand.u32 %v88, 4294901760
    %927 = vmatprep.subr.mxu0 %v926
    %v928 = vand.u32 %v87, 4294901760
    %929 = vmatpush2.msra.mxu0 %v928
    %v930 = vand.u32 %v86, 4294901760
    %931 = vmatprep.subr.mxu0 %v930
    %v932 = vand.u32 %v85, 4294901760
    %933 = vmatpush2.msra.mxu0 %v932
    %v934 = vand.u32 %v84, 4294901760
    %935 = vmatprep.subr.mxu0 %v934
    %v936 = vand.u32 %v83, 4294901760
    %937 = vmatpush2.msra.mxu0 %v936
    %v938 = vand.u32 %v82, 4294901760
    %939 = vmatprep.subr.mxu0 %v938
    %v940 = vand.u32 %v81, 4294901760
    %941 = vmatpush2.msra.mxu0 %v940
    %v942 = vand.u32 %v80, 4294901760
    %943 = vmatprep.subr.mxu0 %v942
    %v944 = vand.u32 %v79, 4294901760
    %945 = vmatpush2.msra.mxu0 %v944
    %v946 = vand.u32 %v78, 4294901760
    %947 = vmatprep.subr.mxu0 %v946
    %v948 = vand.u32 %v77, 4294901760
    %949 = vmatpush2.msra.mxu0 %v948
    %v950 = vand.u32 %v76, 4294901760
    %951 = vmatprep.subr.mxu0 %v950
    %v952 = vand.u32 %v75, 4294901760
    %953 = vmatpush2.msra.mxu0 %v952
    %v954 = vand.u32 %v74, 4294901760
    %955 = vmatprep.subr.mxu0 %v954
    %v956 = vand.u32 %v73, 4294901760
    %957 = vmatpush2.msra.mxu0 %v956
    %v958 = vand.u32 %v72, 4294901760
    %959 = vmatprep.subr.mxu0 %v958
    %v960 = vand.u32 %v71, 4294901760
    %961 = vmatpush2.msra.mxu0 %v960
    %v962 = vand.u32 %v70, 4294901760
    %963 = vmatprep.subr.mxu0 %v962
    %v964 = vand.u32 %v69, 4294901760
    %965 = vmatpush2.msra.mxu0 %v964
    %v966 = vand.u32 %v68, 4294901760
    %967 = vmatprep.subr.mxu0 %v966
    %v968 = vand.u32 %v67, 4294901760
    %969 = vmatpush2.msra.mxu0 %v968
    %v970 = vand.u32 %v34, 4294901760
    %v971 = vsub.f32 %v34, %v970
    %v972 = vand.u32 %v971, 4294901760
    %973 = vmatprep.mubr.f32.mxu0 %v972
    %v974 = vand.u32 %v33, 4294901760
    %v975 = vsub.f32 %v33, %v974
    %v976 = vand.u32 %v975, 4294901760
    %977 = vmatmul.mubr.f32.gmra.mxu0 %v976
    %v978 = vpop.f32.mrf.mxu0
    %v979 = vadd.f32 %v838, %v978
    %v980 = vpop.f32.mrf.mxu0
    %v981 = vadd.f32 %v840, %v980
    %982 = vdwg.mxu0
    %v983 = vand.u32 %v66, 4294901760
    %v984 = vsub.f32 %v66, %v983
    %v985 = vand.u32 %v984, 4294901760
    %986 = vmatprep.subr.mxu0 %v985
    %v987 = vand.u32 %v65, 4294901760
    %v988 = vsub.f32 %v65, %v987
    %v989 = vand.u32 %v988, 4294901760
    %990 = vmatpush1.msra.mxu0 %v989
    %v991 = vand.u32 %v64, 4294901760
    %v992 = vsub.f32 %v64, %v991
    %v993 = vand.u32 %v992, 4294901760
    %994 = vmatprep.subr.mxu0 %v993
    %v995 = vand.u32 %v63, 4294901760
    %v996 = vsub.f32 %v63, %v995
    %v997 = vand.u32 %v996, 4294901760
    %998 = vmatpush1.msra.mxu0 %v997
    %v999 = vand.u32 %v62, 4294901760
    %v1000 = vsub.f32 %v62, %v999
    %v1001 = vand.u32 %v1000, 4294901760
    %1002 = vmatprep.subr.mxu0 %v1001
    %v1003 = vand.u32 %v61, 4294901760
    %v1004 = vsub.f32 %v61, %v1003
    %v1005 = vand.u32 %v1004, 4294901760
    %1006 = vmatpush1.msra.mxu0 %v1005
    %v1007 = vand.u32 %v60, 4294901760
    %v1008 = vsub.f32 %v60, %v1007
    %v1009 = vand.u32 %v1008, 4294901760
    %1010 = vmatprep.subr.mxu0 %v1009
    %v1011 = vand.u32 %v59, 4294901760
    %v1012 = vsub.f32 %v59, %v1011
    %v1013 = vand.u32 %v1012, 4294901760
    %1014 = vmatpush1.msra.mxu0 %v1013
    %v1015 = vand.u32 %v58, 4294901760
    %v1016 = vsub.f32 %v58, %v1015
    %v1017 = vand.u32 %v1016, 4294901760
    %1018 = vmatprep.subr.mxu0 %v1017
    %v1019 = vand.u32 %v57, 4294901760
    %v1020 = vsub.f32 %v57, %v1019
    %v1021 = vand.u32 %v1020, 4294901760
    %1022 = vmatpush1.msra.mxu0 %v1021
    %v1023 = vand.u32 %v56, 4294901760
    %v1024 = vsub.f32 %v56, %v1023
    %v1025 = vand.u32 %v1024, 4294901760
    %1026 = vmatprep.subr.mxu0 %v1025
    %v1027 = vand.u32 %v55, 4294901760
    %v1028 = vsub.f32 %v55, %v1027
    %v1029 = vand.u32 %v1028, 4294901760
    %1030 = vmatpush1.msra.mxu0 %v1029
    %v1031 = vand.u32 %v54, 4294901760
    %v1032 = vsub.f32 %v54, %v1031
    %v1033 = vand.u32 %v1032, 4294901760
    %1034 = vmatprep.subr.mxu0 %v1033
    %v1035 = vand.u32 %v53, 4294901760
    %v1036 = vsub.f32 %v53, %v1035
    %v1037 = vand.u32 %v1036, 4294901760
    %1038 = vmatpush1.msra.mxu0 %v1037
    %v1039 = vand.u32 %v52, 4294901760
    %v1040 = vsub.f32 %v52, %v1039
    %v1041 = vand.u32 %v1040, 4294901760
    %1042 = vmatprep.subr.mxu0 %v1041
    %v1043 = vand.u32 %v51, 4294901760
    %v1044 = vsub.f32 %v51, %v1043
    %v1045 = vand.u32 %v1044, 4294901760
    %1046 = vmatpush1.msra.mxu0 %v1045
    %v1047 = vand.u32 %v50, 4294901760
    %v1048 = vsub.f32 %v50, %v1047
    %v1049 = vand.u32 %v1048, 4294901760
    %1050 = vmatprep.subr.mxu0 %v1049
    %v1051 = vand.u32 %v49, 4294901760
    %v1052 = vsub.f32 %v49, %v1051
    %v1053 = vand.u32 %v1052, 4294901760
    %1054 = vmatpush1.msra.mxu0 %v1053
    %v1055 = vand.u32 %v48, 4294901760
    %v1056 = vsub.f32 %v48, %v1055
    %v1057 = vand.u32 %v1056, 4294901760
    %1058 = vmatprep.subr.mxu0 %v1057
    %v1059 = vand.u32 %v47, 4294901760
    %v1060 = vsub.f32 %v47, %v1059
    %v1061 = vand.u32 %v1060, 4294901760
    %1062 = vmatpush1.msra.mxu0 %v1061
    %v1063 = vand.u32 %v46, 4294901760
    %v1064 = vsub.f32 %v46, %v1063
    %v1065 = vand.u32 %v1064, 4294901760
    %1066 = vmatprep.subr.mxu0 %v1065
    %v1067 = vand.u32 %v45, 4294901760
    %v1068 = vsub.f32 %v45, %v1067
    %v1069 = vand.u32 %v1068, 4294901760
    %1070 = vmatpush1.msra.mxu0 %v1069
    %v1071 = vand.u32 %v44, 4294901760
    %v1072 = vsub.f32 %v44, %v1071
    %v1073 = vand.u32 %v1072, 4294901760
    %1074 = vmatprep.subr.mxu0 %v1073
    %v1075 = vand.u32 %v43, 4294901760
    %v1076 = vsub.f32 %v43, %v1075
    %v1077 = vand.u32 %v1076, 4294901760
    %1078 = vmatpush1.msra.mxu0 %v1077
    %v1079 = vand.u32 %v42, 4294901760
    %v1080 = vsub.f32 %v42, %v1079
    %v1081 = vand.u32 %v1080, 4294901760
    %1082 = vmatprep.subr.mxu0 %v1081
    %v1083 = vand.u32 %v41, 4294901760
    %v1084 = vsub.f32 %v41, %v1083
    %v1085 = vand.u32 %v1084, 4294901760
    %1086 = vmatpush1.msra.mxu0 %v1085
    %v1087 = vand.u32 %v40, 4294901760
    %v1088 = vsub.f32 %v40, %v1087
    %v1089 = vand.u32 %v1088, 4294901760
    %1090 = vmatprep.subr.mxu0 %v1089
    %v1091 = vand.u32 %v39, 4294901760
    %v1092 = vsub.f32 %v39, %v1091
    %v1093 = vand.u32 %v1092, 4294901760
    %1094 = vmatpush1.msra.mxu0 %v1093
    %v1095 = vand.u32 %v38, 4294901760
    %v1096 = vsub.f32 %v38, %v1095
    %v1097 = vand.u32 %v1096, 4294901760
    %1098 = vmatprep.subr.mxu0 %v1097
    %v1099 = vand.u32 %v37, 4294901760
    %v1100 = vsub.f32 %v37, %v1099
    %v1101 = vand.u32 %v1100, 4294901760
    %1102 = vmatpush1.msra.mxu0 %v1101
    %v1103 = vand.u32 %v36, 4294901760
    %v1104 = vsub.f32 %v36, %v1103
    %v1105 = vand.u32 %v1104, 4294901760
    %1106 = vmatprep.subr.mxu0 %v1105
    %v1107 = vand.u32 %v35, 4294901760
    %v1108 = vsub.f32 %v35, %v1107
    %v1109 = vand.u32 %v1108, 4294901760
    %1110 = vmatpush1.msra.mxu0 %v1109
    %v1111 = vand.u32 %v98, 4294901760
    %v1112 = vsub.f32 %v98, %v1111
    %v1113 = vand.u32 %v1112, 4294901760
    %1114 = vmatprep.subr.mxu0 %v1113
    %v1115 = vand.u32 %v97, 4294901760
    %v1116 = vsub.f32 %v97, %v1115
    %v1117 = vand.u32 %v1116, 4294901760
    %1118 = vmatpush2.msra.mxu0 %v1117
    %v1119 = vand.u32 %v96, 4294901760
    %v1120 = vsub.f32 %v96, %v1119
    %v1121 = vand.u32 %v1120, 4294901760
    %1122 = vmatprep.subr.mxu0 %v1121
    %v1123 = vand.u32 %v95, 4294901760
    %v1124 = vsub.f32 %v95, %v1123
    %v1125 = vand.u32 %v1124, 4294901760
    %1126 = vmatpush2.msra.mxu0 %v1125
    %v1127 = vand.u32 %v94, 4294901760
    %v1128 = vsub.f32 %v94, %v1127
    %v1129 = vand.u32 %v1128, 4294901760
    %1130 = vmatprep.subr.mxu0 %v1129
    %v1131 = vand.u32 %v93, 4294901760
    %v1132 = vsub.f32 %v93, %v1131
    %v1133 = vand.u32 %v1132, 4294901760
    %1134 = vmatpush2.msra.mxu0 %v1133
    %v1135 = vand.u32 %v92, 4294901760
    %v1136 = vsub.f32 %v92, %v1135
    %v1137 = vand.u32 %v1136, 4294901760
    %1138 = vmatprep.subr.mxu0 %v1137
    %v1139 = vand.u32 %v91, 4294901760
    %v1140 = vsub.f32 %v91, %v1139
    %v1141 = vand.u32 %v1140, 4294901760
    %1142 = vmatpush2.msra.mxu0 %v1141
    %v1143 = vand.u32 %v90, 4294901760
    %v1144 = vsub.f32 %v90, %v1143
    %v1145 = vand.u32 %v1144, 4294901760
    %1146 = vmatprep.subr.mxu0 %v1145
    %v1147 = vand.u32 %v89, 4294901760
    %v1148 = vsub.f32 %v89, %v1147
    %v1149 = vand.u32 %v1148, 4294901760
    %1150 = vmatpush2.msra.mxu0 %v1149
    %v1151 = vand.u32 %v88, 4294901760
    %v1152 = vsub.f32 %v88, %v1151
    %v1153 = vand.u32 %v1152, 4294901760
    %1154 = vmatprep.subr.mxu0 %v1153
    %v1155 = vand.u32 %v87, 4294901760
    %v1156 = vsub.f32 %v87, %v1155
    %v1157 = vand.u32 %v1156, 4294901760
    %1158 = vmatpush2.msra.mxu0 %v1157
    %v1159 = vand.u32 %v86, 4294901760
    %v1160 = vsub.f32 %v86, %v1159
    %v1161 = vand.u32 %v1160, 4294901760
    %1162 = vmatprep.subr.mxu0 %v1161
    %v1163 = vand.u32 %v85, 4294901760
    %v1164 = vsub.f32 %v85, %v1163
    %v1165 = vand.u32 %v1164, 4294901760
    %1166 = vmatpush2.msra.mxu0 %v1165
    %v1167 = vand.u32 %v84, 4294901760
    %v1168 = vsub.f32 %v84, %v1167
    %v1169 = vand.u32 %v1168, 4294901760
    %1170 = vmatprep.subr.mxu0 %v1169
    %v1171 = vand.u32 %v83, 4294901760
    %v1172 = vsub.f32 %v83, %v1171
    %v1173 = vand.u32 %v1172, 4294901760
    %1174 = vmatpush2.msra.mxu0 %v1173
    %v1175 = vand.u32 %v82, 4294901760
    %v1176 = vsub.f32 %v82, %v1175
    %v1177 = vand.u32 %v1176, 4294901760
    %1178 = vmatprep.subr.mxu0 %v1177
    %v1179 = vand.u32 %v81, 4294901760
    %v1180 = vsub.f32 %v81, %v1179
    %v1181 = vand.u32 %v1180, 4294901760
    %1182 = vmatpush2.msra.mxu0 %v1181
    %v1183 = vand.u32 %v80, 4294901760
    %v1184 = vsub.f32 %v80, %v1183
    %v1185 = vand.u32 %v1184, 4294901760
    %1186 = vmatprep.subr.mxu0 %v1185
    %v1187 = vand.u32 %v79, 4294901760
    %v1188 = vsub.f32 %v79, %v1187
    %v1189 = vand.u32 %v1188, 4294901760
    %1190 = vmatpush2.msra.mxu0 %v1189
    %v1191 = vand.u32 %v78, 4294901760
    %v1192 = vsub.f32 %v78, %v1191
    %v1193 = vand.u32 %v1192, 4294901760
    %1194 = vmatprep.subr.mxu0 %v1193
    %v1195 = vand.u32 %v77, 4294901760
    %v1196 = vsub.f32 %v77, %v1195
    %v1197 = vand.u32 %v1196, 4294901760
    %1198 = vmatpush2.msra.mxu0 %v1197
    %v1199 = vand.u32 %v76, 4294901760
    %v1200 = vsub.f32 %v76, %v1199
    %v1201 = vand.u32 %v1200, 4294901760
    %1202 = vmatprep.subr.mxu0 %v1201
    %v1203 = vand.u32 %v75, 4294901760
    %v1204 = vsub.f32 %v75, %v1203
    %v1205 = vand.u32 %v1204, 4294901760
    %1206 = vmatpush2.msra.mxu0 %v1205
    %v1207 = vand.u32 %v74, 4294901760
    %v1208 = vsub.f32 %v74, %v1207
    %v1209 = vand.u32 %v1208, 4294901760
    %1210 = vmatprep.subr.mxu0 %v1209
    %v1211 = vand.u32 %v73, 4294901760
    %v1212 = vsub.f32 %v73, %v1211
    %v1213 = vand.u32 %v1212, 4294901760
    %1214 = vmatpush2.msra.mxu0 %v1213
    %v1215 = vand.u32 %v72, 4294901760
    %v1216 = vsub.f32 %v72, %v1215
    %v1217 = vand.u32 %v1216, 4294901760
    %1218 = vmatprep.subr.mxu0 %v1217
    %v1219 = vand.u32 %v71, 4294901760
    %v1220 = vsub.f32 %v71, %v1219
    %v1221 = vand.u32 %v1220, 4294901760
    %1222 = vmatpush2.msra.mxu0 %v1221
    %v1223 = vand.u32 %v70, 4294901760
    %v1224 = vsub.f32 %v70, %v1223
    %v1225 = vand.u32 %v1224, 4294901760
    %1226 = vmatprep.subr.mxu0 %v1225
    %v1227 = vand.u32 %v69, 4294901760
    %v1228 = vsub.f32 %v69, %v1227
    %v1229 = vand.u32 %v1228, 4294901760
    %1230 = vmatpush2.msra.mxu0 %v1229
    %v1231 = vand.u32 %v68, 4294901760
    %v1232 = vsub.f32 %v68, %v1231
    %v1233 = vand.u32 %v1232, 4294901760
    %1234 = vmatprep.subr.mxu0 %v1233
    %v1235 = vand.u32 %v67, 4294901760
    %v1236 = vsub.f32 %v67, %v1235
    %v1237 = vand.u32 %v1236, 4294901760
    %1238 = vmatpush2.msra.mxu0 %v1237
    %v1239 = vand.u32 %v34, 4294901760
    %1240 = vmatprep.mubr.f32.mxu0 %v1239
    %v1241 = vand.u32 %v33, 4294901760
    %1242 = vmatmul.mubr.f32.gmra.mxu0 %v1241
    %v1243 = vpop.f32.mrf.mxu0
    %v1244 = vadd.f32 %v979, %v1243
    %v1245 = vpop.f32.mrf.mxu0
    %v1246 = vadd.f32 %v981, %v1245
    %1247 = vdwg.mxu0
    %v1248 = vand.u32 %v66, 4294901760
    %1249 = vmatprep.subr.mxu0 %v1248
    %v1250 = vand.u32 %v65, 4294901760
    %1251 = vmatpush1.msra.mxu0 %v1250
    %v1252 = vand.u32 %v64, 4294901760
    %1253 = vmatprep.subr.mxu0 %v1252
    %v1254 = vand.u32 %v63, 4294901760
    %1255 = vmatpush1.msra.mxu0 %v1254
    %v1256 = vand.u32 %v62, 4294901760
    %1257 = vmatprep.subr.mxu0 %v1256
    %v1258 = vand.u32 %v61, 4294901760
    %1259 = vmatpush1.msra.mxu0 %v1258
    %v1260 = vand.u32 %v60, 4294901760
    %1261 = vmatprep.subr.mxu0 %v1260
    %v1262 = vand.u32 %v59, 4294901760
    %1263 = vmatpush1.msra.mxu0 %v1262
    %v1264 = vand.u32 %v58, 4294901760
    %1265 = vmatprep.subr.mxu0 %v1264
    %v1266 = vand.u32 %v57, 4294901760
    %1267 = vmatpush1.msra.mxu0 %v1266
    %v1268 = vand.u32 %v56, 4294901760
    %1269 = vmatprep.subr.mxu0 %v1268
    %v1270 = vand.u32 %v55, 4294901760
    %1271 = vmatpush1.msra.mxu0 %v1270
    %v1272 = vand.u32 %v54, 4294901760
    %1273 = vmatprep.subr.mxu0 %v1272
    %v1274 = vand.u32 %v53, 4294901760
    %1275 = vmatpush1.msra.mxu0 %v1274
    %v1276 = vand.u32 %v52, 4294901760
    %1277 = vmatprep.subr.mxu0 %v1276
    %v1278 = vand.u32 %v51, 4294901760
    %1279 = vmatpush1.msra.mxu0 %v1278
    %v1280 = vand.u32 %v50, 4294901760
    %1281 = vmatprep.subr.mxu0 %v1280
    %v1282 = vand.u32 %v49, 4294901760
    %1283 = vmatpush1.msra.mxu0 %v1282
    %v1284 = vand.u32 %v48, 4294901760
    %1285 = vmatprep.subr.mxu0 %v1284
    %v1286 = vand.u32 %v47, 4294901760
    %1287 = vmatpush1.msra.mxu0 %v1286
    %v1288 = vand.u32 %v46, 4294901760
    %1289 = vmatprep.subr.mxu0 %v1288
    %v1290 = vand.u32 %v45, 4294901760
    %1291 = vmatpush1.msra.mxu0 %v1290
    %v1292 = vand.u32 %v44, 4294901760
    %1293 = vmatprep.subr.mxu0 %v1292
    %v1294 = vand.u32 %v43, 4294901760
    %1295 = vmatpush1.msra.mxu0 %v1294
    %v1296 = vand.u32 %v42, 4294901760
    %1297 = vmatprep.subr.mxu0 %v1296
    %v1298 = vand.u32 %v41, 4294901760
    %1299 = vmatpush1.msra.mxu0 %v1298
    %v1300 = vand.u32 %v40, 4294901760
    %1301 = vmatprep.subr.mxu0 %v1300
    %v1302 = vand.u32 %v39, 4294901760
    %1303 = vmatpush1.msra.mxu0 %v1302
    %v1304 = vand.u32 %v38, 4294901760
    %1305 = vmatprep.subr.mxu0 %v1304
    %v1306 = vand.u32 %v37, 4294901760
    %1307 = vmatpush1.msra.mxu0 %v1306
    %v1308 = vand.u32 %v36, 4294901760
    %1309 = vmatprep.subr.mxu0 %v1308
    %v1310 = vand.u32 %v35, 4294901760
    %1311 = vmatpush1.msra.mxu0 %v1310
    %v1312 = vand.u32 %v98, 4294901760
    %1313 = vmatprep.subr.mxu0 %v1312
    %v1314 = vand.u32 %v97, 4294901760
    %1315 = vmatpush2.msra.mxu0 %v1314
    %v1316 = vand.u32 %v96, 4294901760
    %1317 = vmatprep.subr.mxu0 %v1316
    %v1318 = vand.u32 %v95, 4294901760
    %1319 = vmatpush2.msra.mxu0 %v1318
    %v1320 = vand.u32 %v94, 4294901760
    %1321 = vmatprep.subr.mxu0 %v1320
    %v1322 = vand.u32 %v93, 4294901760
    %1323 = vmatpush2.msra.mxu0 %v1322
    %v1324 = vand.u32 %v92, 4294901760
    %1325 = vmatprep.subr.mxu0 %v1324
    %v1326 = vand.u32 %v91, 4294901760
    %1327 = vmatpush2.msra.mxu0 %v1326
    %v1328 = vand.u32 %v90, 4294901760
    %1329 = vmatprep.subr.mxu0 %v1328
    %v1330 = vand.u32 %v89, 4294901760
    %1331 = vmatpush2.msra.mxu0 %v1330
    %v1332 = vand.u32 %v88, 4294901760
    %1333 = vmatprep.subr.mxu0 %v1332
    %v1334 = vand.u32 %v87, 4294901760
    %1335 = vmatpush2.msra.mxu0 %v1334
    %v1336 = vand.u32 %v86, 4294901760
    %1337 = vmatprep.subr.mxu0 %v1336
    %v1338 = vand.u32 %v85, 4294901760
    %1339 = vmatpush2.msra.mxu0 %v1338
    %v1340 = vand.u32 %v84, 4294901760
    %1341 = vmatprep.subr.mxu0 %v1340
    %v1342 = vand.u32 %v83, 4294901760
    %1343 = vmatpush2.msra.mxu0 %v1342
    %v1344 = vand.u32 %v82, 4294901760
    %1345 = vmatprep.subr.mxu0 %v1344
    %v1346 = vand.u32 %v81, 4294901760
    %1347 = vmatpush2.msra.mxu0 %v1346
    %v1348 = vand.u32 %v80, 4294901760
    %1349 = vmatprep.subr.mxu0 %v1348
    %v1350 = vand.u32 %v79, 4294901760
    %1351 = vmatpush2.msra.mxu0 %v1350
    %v1352 = vand.u32 %v78, 4294901760
    %1353 = vmatprep.subr.mxu0 %v1352
    %v1354 = vand.u32 %v77, 4294901760
    %1355 = vmatpush2.msra.mxu0 %v1354
    %v1356 = vand.u32 %v76, 4294901760
    %1357 = vmatprep.subr.mxu0 %v1356
    %v1358 = vand.u32 %v75, 4294901760
    %1359 = vmatpush2.msra.mxu0 %v1358
    %v1360 = vand.u32 %v74, 4294901760
    %1361 = vmatprep.subr.mxu0 %v1360
    %v1362 = vand.u32 %v73, 4294901760
    %1363 = vmatpush2.msra.mxu0 %v1362
    %v1364 = vand.u32 %v72, 4294901760
    %1365 = vmatprep.subr.mxu0 %v1364
    %v1366 = vand.u32 %v71, 4294901760
    %1367 = vmatpush2.msra.mxu0 %v1366
    %v1368 = vand.u32 %v70, 4294901760
    %1369 = vmatprep.subr.mxu0 %v1368
    %v1370 = vand.u32 %v69, 4294901760
    %1371 = vmatpush2.msra.mxu0 %v1370
    %v1372 = vand.u32 %v68, 4294901760
    %1373 = vmatprep.subr.mxu0 %v1372
    %v1374 = vand.u32 %v67, 4294901760
    %1375 = vmatpush2.msra.mxu0 %v1374
    %v1376 = vand.u32 %v34, 4294901760
    %1377 = vmatprep.mubr.f32.mxu0 %v1376
    %v1378 = vand.u32 %v33, 4294901760
    %1379 = vmatmul.mubr.f32.gmra.mxu0 %v1378
    %v1380 = vpop.f32.mrf.mxu0
    %v1381 = vadd.f32 %v1244, %v1380
    %v1382 = vpop.f32.mrf.mxu0
    %v1383 = vadd.f32 %v1246, %v1382
    %1384 = vdwg.mxu0
    %v1385 = vmax.f32 %v1381, 0.0
    %v1386 = vmax.f32 %v1383, 0.0
    %v1387 = vld [vmem:[%s3] sm:$0xff]
    %v1388 = vld [vmem:[%s3 + $0x8] sm:$0xff]
    %v1389 = vld [vmem:[%s3 + $0x10] sm:$0xff]
    %v1390 = vld [vmem:[%s3 + $0x18] sm:$0xff]
    %v1391 = vld [vmem:[%s3 + $0x20] sm:$0xff]
    %v1392 = vld [vmem:[%s3 + $0x28] sm:$0xff]
    %v1393 = vld [vmem:[%s3 + $0x30] sm:$0xff]
    %v1394 = vld [vmem:[%s3 + $0x38] sm:$0xff]
    %v1395 = vld [vmem:[%s3 + $0x40] sm:$0xff]
    %v1396 = vld [vmem:[%s3 + $0x48] sm:$0xff]
    %v1397 = vld [vmem:[%s3 + $0x50] sm:$0xff]
    %v1398 = vld [vmem:[%s3 + $0x58] sm:$0xff]
    %v1399 = vld [vmem:[%s3 + $0x60] sm:$0xff]
    %v1400 = vld [vmem:[%s3 + $0x68] sm:$0xff]
    %v1401 = vld [vmem:[%s3 + $0x70] sm:$0xff]
    %v1402 = vld [vmem:[%s3 + $0x78] sm:$0xff]
    %v1403 = vld [vmem:[%s3 + $0x80] sm:$0xff]
    %v1404 = vld [vmem:[%s3 + $0x88] sm:$0xff]
    %v1405 = vld [vmem:[%s3 + $0x90] sm:$0xff]
    %v1406 = vld [vmem:[%s3 + $0x98] sm:$0xff]
    %v1407 = vld [vmem:[%s3 + $0xa0] sm:$0xff]
    %v1408 = vld [vmem:[%s3 + $0xa8] sm:$0xff]
    %v1409 = vld [vmem:[%s3 + $0xb0] sm:$0xff]
    %v1410 = vld [vmem:[%s3 + $0xb8] sm:$0xff]
    %v1411 = vld [vmem:[%s3 + $0xc0] sm:$0xff]
    %v1412 = vld [vmem:[%s3 + $0xc8] sm:$0xff]
    %v1413 = vld [vmem:[%s3 + $0xd0] sm:$0xff]
    %v1414 = vld [vmem:[%s3 + $0xd8] sm:$0xff]
    %v1415 = vld [vmem:[%s3 + $0xe0] sm:$0xff]
    %v1416 = vld [vmem:[%s3 + $0xe8] sm:$0xff]
    %v1417 = vld [vmem:[%s3 + $0xf0] sm:$0xff]
    %v1418 = vld [vmem:[%s3 + $0xf8] sm:$0xff]
    %1419 = vmatprep.subr.mxu0 0.0
    %v1420 = vand.u32 %v1402, 4294901760
    %1421 = vmatpush1.msra.mxu0 %v1420
    %1422 = vmatprep.subr.mxu0 0.0
    %v1423 = vand.u32 %v1401, 4294901760
    %1424 = vmatpush1.msra.mxu0 %v1423
    %1425 = vmatprep.subr.mxu0 0.0
    %v1426 = vand.u32 %v1400, 4294901760
    %1427 = vmatpush1.msra.mxu0 %v1426
    %1428 = vmatprep.subr.mxu0 0.0
    %v1429 = vand.u32 %v1399, 4294901760
    %1430 = vmatpush1.msra.mxu0 %v1429
    %1431 = vmatprep.subr.mxu0 0.0
    %v1432 = vand.u32 %v1398, 4294901760
    %1433 = vmatpush1.msra.mxu0 %v1432
    %1434 = vmatprep.subr.mxu0 0.0
    %v1435 = vand.u32 %v1397, 4294901760
    %1436 = vmatpush1.msra.mxu0 %v1435
    %1437 = vmatprep.subr.mxu0 0.0
    %v1438 = vand.u32 %v1396, 4294901760
    %1439 = vmatpush1.msra.mxu0 %v1438
    %1440 = vmatprep.subr.mxu0 0.0
    %v1441 = vand.u32 %v1395, 4294901760
    %1442 = vmatpush1.msra.mxu0 %v1441
    %1443 = vmatprep.subr.mxu0 0.0
    %v1444 = vand.u32 %v1394, 4294901760
    %1445 = vmatpush1.msra.mxu0 %v1444
    %1446 = vmatprep.subr.mxu0 0.0
    %v1447 = vand.u32 %v1393, 4294901760
    %1448 = vmatpush1.msra.mxu0 %v1447
    %1449 = vmatprep.subr.mxu0 0.0
    %v1450 = vand.u32 %v1392, 4294901760
    %1451 = vmatpush1.msra.mxu0 %v1450
    %1452 = vmatprep.subr.mxu0 0.0
    %v1453 = vand.u32 %v1391, 4294901760
    %1454 = vmatpush1.msra.mxu0 %v1453
    %1455 = vmatprep.subr.mxu0 0.0
    %v1456 = vand.u32 %v1390, 4294901760
    %1457 = vmatpush1.msra.mxu0 %v1456
    %1458 = vmatprep.subr.mxu0 0.0
    %v1459 = vand.u32 %v1389, 4294901760
    %1460 = vmatpush1.msra.mxu0 %v1459
    %1461 = vmatprep.subr.mxu0 0.0
    %v1462 = vand.u32 %v1388, 4294901760
    %1463 = vmatpush1.msra.mxu0 %v1462
    %1464 = vmatprep.subr.mxu0 0.0
    %v1465 = vand.u32 %v1387, 4294901760
    %1466 = vmatpush1.msra.mxu0 %v1465
    %1467 = vmatprep.subr.mxu0 0.0
    %v1468 = vand.u32 %v1418, 4294901760
    %1469 = vmatpush2.msra.mxu0 %v1468
    %1470 = vmatprep.subr.mxu0 0.0
    %v1471 = vand.u32 %v1417, 4294901760
    %1472 = vmatpush2.msra.mxu0 %v1471
    %1473 = vmatprep.subr.mxu0 0.0
    %v1474 = vand.u32 %v1416, 4294901760
    %1475 = vmatpush2.msra.mxu0 %v1474
    %1476 = vmatprep.subr.mxu0 0.0
    %v1477 = vand.u32 %v1415, 4294901760
    %1478 = vmatpush2.msra.mxu0 %v1477
    %1479 = vmatprep.subr.mxu0 0.0
    %v1480 = vand.u32 %v1414, 4294901760
    %1481 = vmatpush2.msra.mxu0 %v1480
    %1482 = vmatprep.subr.mxu0 0.0
    %v1483 = vand.u32 %v1413, 4294901760
    %1484 = vmatpush2.msra.mxu0 %v1483
    %1485 = vmatprep.subr.mxu0 0.0
    %v1486 = vand.u32 %v1412, 4294901760
    %1487 = vmatpush2.msra.mxu0 %v1486
    %1488 = vmatprep.subr.mxu0 0.0
    %v1489 = vand.u32 %v1411, 4294901760
    %1490 = vmatpush2.msra.mxu0 %v1489
    %1491 = vmatprep.subr.mxu0 0.0
    %v1492 = vand.u32 %v1410, 4294901760
    %1493 = vmatpush2.msra.mxu0 %v1492
    %1494 = vmatprep.subr.mxu0 0.0
    %v1495 = vand.u32 %v1409, 4294901760
    %1496 = vmatpush2.msra.mxu0 %v1495
    %1497 = vmatprep.subr.mxu0 0.0
    %v1498 = vand.u32 %v1408, 4294901760
    %1499 = vmatpush2.msra.mxu0 %v1498
    %1500 = vmatprep.subr.mxu0 0.0
    %v1501 = vand.u32 %v1407, 4294901760
    %1502 = vmatpush2.msra.mxu0 %v1501
    %1503 = vmatprep.subr.mxu0 0.0
    %v1504 = vand.u32 %v1406, 4294901760
    %1505 = vmatpush2.msra.mxu0 %v1504
    %1506 = vmatprep.subr.mxu0 0.0
    %v1507 = vand.u32 %v1405, 4294901760
    %1508 = vmatpush2.msra.mxu0 %v1507
    %1509 = vmatprep.subr.mxu0 0.0
    %v1510 = vand.u32 %v1404, 4294901760
    %1511 = vmatpush2.msra.mxu0 %v1510
    %1512 = vmatprep.subr.mxu0 0.0
    %v1513 = vand.u32 %v1403, 4294901760
    %1514 = vmatpush2.msra.mxu0 %v1513
    %v1515 = vand.u32 %v1386, 4294901760
    %v1516 = vsub.f32 %v1386, %v1515
    %v1517 = vand.u32 %v1516, 4294901760
    %v1518 = vsub.f32 %v1516, %v1517
    %v1519 = vand.u32 %v1518, 4294901760
    %1520 = vmatprep.mubr.f32.mxu0 %v1519
    %v1521 = vand.u32 %v1385, 4294901760
    %v1522 = vsub.f32 %v1385, %v1521
    %v1523 = vand.u32 %v1522, 4294901760
    %v1524 = vsub.f32 %v1522, %v1523
    %v1525 = vand.u32 %v1524, 4294901760
    %1526 = vmatmul.mubr.f32.gmra.mxu0 %v1525
    %v1527 = vpop.f32.mrf.mxu0
    %v1528 = vadd.f32 0.0, %v1527
    %v1529 = vpop.f32.mrf.mxu0
    %1530 = vdwg.mxu0
    %1531 = vmatprep.subr.mxu0 0.0
    %v1532 = vand.u32 %v1402, 4294901760
    %v1533 = vsub.f32 %v1402, %v1532
    %v1534 = vand.u32 %v1533, 4294901760
    %v1535 = vsub.f32 %v1533, %v1534
    %v1536 = vand.u32 %v1535, 4294901760
    %1537 = vmatpush1.msra.mxu0 %v1536
    %1538 = vmatprep.subr.mxu0 0.0
    %v1539 = vand.u32 %v1401, 4294901760
    %v1540 = vsub.f32 %v1401, %v1539
    %v1541 = vand.u32 %v1540, 4294901760
    %v1542 = vsub.f32 %v1540, %v1541
    %v1543 = vand.u32 %v1542, 4294901760
    %1544 = vmatpush1.msra.mxu0 %v1543
    %1545 = vmatprep.subr.mxu0 0.0
    %v1546 = vand.u32 %v1400, 4294901760
    %v1547 = vsub.f32 %v1400, %v1546
    %v1548 = vand.u32 %v1547, 4294901760
    %v1549 = vsub.f32 %v1547, %v1548
    %v1550 = vand.u32 %v1549, 4294901760
    %1551 = vmatpush1.msra.mxu0 %v1550
    %1552 = vmatprep.subr.mxu0 0.0
    %v1553 = vand.u32 %v1399, 4294901760
    %v1554 = vsub.f32 %v1399, %v1553
    %v1555 = vand.u32 %v1554, 4294901760
    %v1556 = vsub.f32 %v1554, %v1555
    %v1557 = vand.u32 %v1556, 4294901760
    %1558 = vmatpush1.msra.mxu0 %v1557
    %1559 = vmatprep.subr.mxu0 0.0
    %v1560 = vand.u32 %v1398, 4294901760
    %v1561 = vsub.f32 %v1398, %v1560
    %v1562 = vand.u32 %v1561, 4294901760
    %v1563 = vsub.f32 %v1561, %v1562
    %v1564 = vand.u32 %v1563, 4294901760
    %1565 = vmatpush1.msra.mxu0 %v1564
    %1566 = vmatprep.subr.mxu0 0.0
    %v1567 = vand.u32 %v1397, 4294901760
    %v1568 = vsub.f32 %v1397, %v1567
    %v1569 = vand.u32 %v1568, 4294901760
    %v1570 = vsub.f32 %v1568, %v1569
    %v1571 = vand.u32 %v1570, 4294901760
    %1572 = vmatpush1.msra.mxu0 %v1571
    %1573 = vmatprep.subr.mxu0 0.0
    %v1574 = vand.u32 %v1396, 4294901760
    %v1575 = vsub.f32 %v1396, %v1574
    %v1576 = vand.u32 %v1575, 4294901760
    %v1577 = vsub.f32 %v1575, %v1576
    %v1578 = vand.u32 %v1577, 4294901760
    %1579 = vmatpush1.msra.mxu0 %v1578
    %1580 = vmatprep.subr.mxu0 0.0
    %v1581 = vand.u32 %v1395, 4294901760
    %v1582 = vsub.f32 %v1395, %v1581
    %v1583 = vand.u32 %v1582, 4294901760
    %v1584 = vsub.f32 %v1582, %v1583
    %v1585 = vand.u32 %v1584, 4294901760
    %1586 = vmatpush1.msra.mxu0 %v1585
    %1587 = vmatprep.subr.mxu0 0.0
    %v1588 = vand.u32 %v1394, 4294901760
    %v1589 = vsub.f32 %v1394, %v1588
    %v1590 = vand.u32 %v1589, 4294901760
    %v1591 = vsub.f32 %v1589, %v1590
    %v1592 = vand.u32 %v1591, 4294901760
    %1593 = vmatpush1.msra.mxu0 %v1592
    %1594 = vmatprep.subr.mxu0 0.0
    %v1595 = vand.u32 %v1393, 4294901760
    %v1596 = vsub.f32 %v1393, %v1595
    %v1597 = vand.u32 %v1596, 4294901760
    %v1598 = vsub.f32 %v1596, %v1597
    %v1599 = vand.u32 %v1598, 4294901760
    %1600 = vmatpush1.msra.mxu0 %v1599
    %1601 = vmatprep.subr.mxu0 0.0
    %v1602 = vand.u32 %v1392, 4294901760
    %v1603 = vsub.f32 %v1392, %v1602
    %v1604 = vand.u32 %v1603, 4294901760
    %v1605 = vsub.f32 %v1603, %v1604
    %v1606 = vand.u32 %v1605, 4294901760
    %1607 = vmatpush1.msra.mxu0 %v1606
    %1608 = vmatprep.subr.mxu0 0.0
    %v1609 = vand.u32 %v1391, 4294901760
    %v1610 = vsub.f32 %v1391, %v1609
    %v1611 = vand.u32 %v1610, 4294901760
    %v1612 = vsub.f32 %v1610, %v1611
    %v1613 = vand.u32 %v1612, 4294901760
    %1614 = vmatpush1.msra.mxu0 %v1613
    %1615 = vmatprep.subr.mxu0 0.0
    %v1616 = vand.u32 %v1390, 4294901760
    %v1617 = vsub.f32 %v1390, %v1616
    %v1618 = vand.u32 %v1617, 4294901760
    %v1619 = vsub.f32 %v1617, %v1618
    %v1620 = vand.u32 %v1619, 4294901760
    %1621 = vmatpush1.msra.mxu0 %v1620
    %1622 = vmatprep.subr.mxu0 0.0
    %v1623 = vand.u32 %v1389, 4294901760
    %v1624 = vsub.f32 %v1389, %v1623
    %v1625 = vand.u32 %v1624, 4294901760
    %v1626 = vsub.f32 %v1624, %v1625
    %v1627 = vand.u32 %v1626, 4294901760
    %1628 = vmatpush1.msra.mxu0 %v1627
    %1629 = vmatprep.subr.mxu0 0.0
    %v1630 = vand.u32 %v1388, 4294901760
    %v1631 = vsub.f32 %v1388, %v1630
    %v1632 = vand.u32 %v1631, 4294901760
    %v1633 = vsub.f32 %v1631, %v1632
    %v1634 = vand.u32 %v1633, 4294901760
    %1635 = vmatpush1.msra.mxu0 %v1634
    %1636 = vmatprep.subr.mxu0 0.0
    %v1637 = vand.u32 %v1387, 4294901760
    %v1638 = vsub.f32 %v1387, %v1637
    %v1639 = vand.u32 %v1638, 4294901760
    %v1640 = vsub.f32 %v1638, %v1639
    %v1641 = vand.u32 %v1640, 4294901760
    %1642 = vmatpush1.msra.mxu0 %v1641
    %1643 = vmatprep.subr.mxu0 0.0
    %v1644 = vand.u32 %v1418, 4294901760
    %v1645 = vsub.f32 %v1418, %v1644
    %v1646 = vand.u32 %v1645, 4294901760
    %v1647 = vsub.f32 %v1645, %v1646
    %v1648 = vand.u32 %v1647, 4294901760
    %1649 = vmatpush2.msra.mxu0 %v1648
    %1650 = vmatprep.subr.mxu0 0.0
    %v1651 = vand.u32 %v1417, 4294901760
    %v1652 = vsub.f32 %v1417, %v1651
    %v1653 = vand.u32 %v1652, 4294901760
    %v1654 = vsub.f32 %v1652, %v1653
    %v1655 = vand.u32 %v1654, 4294901760
    %1656 = vmatpush2.msra.mxu0 %v1655
    %1657 = vmatprep.subr.mxu0 0.0
    %v1658 = vand.u32 %v1416, 4294901760
    %v1659 = vsub.f32 %v1416, %v1658
    %v1660 = vand.u32 %v1659, 4294901760
    %v1661 = vsub.f32 %v1659, %v1660
    %v1662 = vand.u32 %v1661, 4294901760
    %1663 = vmatpush2.msra.mxu0 %v1662
    %1664 = vmatprep.subr.mxu0 0.0
    %v1665 = vand.u32 %v1415, 4294901760
    %v1666 = vsub.f32 %v1415, %v1665
    %v1667 = vand.u32 %v1666, 4294901760
    %v1668 = vsub.f32 %v1666, %v1667
    %v1669 = vand.u32 %v1668, 4294901760
    %1670 = vmatpush2.msra.mxu0 %v1669
    %1671 = vmatprep.subr.mxu0 0.0
    %v1672 = vand.u32 %v1414, 4294901760
    %v1673 = vsub.f32 %v1414, %v1672
    %v1674 = vand.u32 %v1673, 4294901760
    %v1675 = vsub.f32 %v1673, %v1674
    %v1676 = vand.u32 %v1675, 4294901760
    %1677 = vmatpush2.msra.mxu0 %v1676
    %1678 = vmatprep.subr.mxu0 0.0
    %v1679 = vand.u32 %v1413, 4294901760
    %v1680 = vsub.f32 %v1413, %v1679
    %v1681 = vand.u32 %v1680, 4294901760
    %v1682 = vsub.f32 %v1680, %v1681
    %v1683 = vand.u32 %v1682, 4294901760
    %1684 = vmatpush2.msra.mxu0 %v1683
    %1685 = vmatprep.subr.mxu0 0.0
    %v1686 = vand.u32 %v1412, 4294901760
    %v1687 = vsub.f32 %v1412, %v1686
    %v1688 = vand.u32 %v1687, 4294901760
    %v1689 = vsub.f32 %v1687, %v1688
    %v1690 = vand.u32 %v1689, 4294901760
    %1691 = vmatpush2.msra.mxu0 %v1690
    %1692 = vmatprep.subr.mxu0 0.0
    %v1693 = vand.u32 %v1411, 4294901760
    %v1694 = vsub.f32 %v1411, %v1693
    %v1695 = vand.u32 %v1694, 4294901760
    %v1696 = vsub.f32 %v1694, %v1695
    %v1697 = vand.u32 %v1696, 4294901760
    %1698 = vmatpush2.msra.mxu0 %v1697
    %1699 = vmatprep.subr.mxu0 0.0
    %v1700 = vand.u32 %v1410, 4294901760
    %v1701 = vsub.f32 %v1410, %v1700
    %v1702 = vand.u32 %v1701, 4294901760
    %v1703 = vsub.f32 %v1701, %v1702
    %v1704 = vand.u32 %v1703, 4294901760
    %1705 = vmatpush2.msra.mxu0 %v1704
    %1706 = vmatprep.subr.mxu0 0.0
    %v1707 = vand.u32 %v1409, 4294901760
    %v1708 = vsub.f32 %v1409, %v1707
    %v1709 = vand.u32 %v1708, 4294901760
    %v1710 = vsub.f32 %v1708, %v1709
    %v1711 = vand.u32 %v1710, 4294901760
    %1712 = vmatpush2.msra.mxu0 %v1711
    %1713 = vmatprep.subr.mxu0 0.0
    %v1714 = vand.u32 %v1408, 4294901760
    %v1715 = vsub.f32 %v1408, %v1714
    %v1716 = vand.u32 %v1715, 4294901760
    %v1717 = vsub.f32 %v1715, %v1716
    %v1718 = vand.u32 %v1717, 4294901760
    %1719 = vmatpush2.msra.mxu0 %v1718
    %1720 = vmatprep.subr.mxu0 0.0
    %v1721 = vand.u32 %v1407, 4294901760
    %v1722 = vsub.f32 %v1407, %v1721
    %v1723 = vand.u32 %v1722, 4294901760
    %v1724 = vsub.f32 %v1722, %v1723
    %v1725 = vand.u32 %v1724, 4294901760
    %1726 = vmatpush2.msra.mxu0 %v1725
    %1727 = vmatprep.subr.mxu0 0.0
    %v1728 = vand.u32 %v1406, 4294901760
    %v1729 = vsub.f32 %v1406, %v1728
    %v1730 = vand.u32 %v1729, 4294901760
    %v1731 = vsub.f32 %v1729, %v1730
    %v1732 = vand.u32 %v1731, 4294901760
    %1733 = vmatpush2.msra.mxu0 %v1732
    %1734 = vmatprep.subr.mxu0 0.0
    %v1735 = vand.u32 %v1405, 4294901760
    %v1736 = vsub.f32 %v1405, %v1735
    %v1737 = vand.u32 %v1736, 4294901760
    %v1738 = vsub.f32 %v1736, %v1737
    %v1739 = vand.u32 %v1738, 4294901760
    %1740 = vmatpush2.msra.mxu0 %v1739
    %1741 = vmatprep.subr.mxu0 0.0
    %v1742 = vand.u32 %v1404, 4294901760
    %v1743 = vsub.f32 %v1404, %v1742
    %v1744 = vand.u32 %v1743, 4294901760
    %v1745 = vsub.f32 %v1743, %v1744
    %v1746 = vand.u32 %v1745, 4294901760
    %1747 = vmatpush2.msra.mxu0 %v1746
    %1748 = vmatprep.subr.mxu0 0.0
    %v1749 = vand.u32 %v1403, 4294901760
    %v1750 = vsub.f32 %v1403, %v1749
    %v1751 = vand.u32 %v1750, 4294901760
    %v1752 = vsub.f32 %v1750, %v1751
    %v1753 = vand.u32 %v1752, 4294901760
    %1754 = vmatpush2.msra.mxu0 %v1753
    %v1755 = vand.u32 %v1386, 4294901760
    %1756 = vmatprep.mubr.f32.mxu0 %v1755
    %v1757 = vand.u32 %v1385, 4294901760
    %1758 = vmatmul.mubr.f32.gmra.mxu0 %v1757
    %v1759 = vpop.f32.mrf.mxu0
    %v1760 = vadd.f32 %v1528, %v1759
    %v1761 = vpop.f32.mrf.mxu0
    %1762 = vdwg.mxu0
    %1763 = vmatprep.subr.mxu0 0.0
    %v1764 = vand.u32 %v1402, 4294901760
    %v1765 = vsub.f32 %v1402, %v1764
    %1766 = vmatpush1.msra.mxu0 %v1765
    %1767 = vmatprep.subr.mxu0 0.0
    %v1768 = vand.u32 %v1401, 4294901760
    %v1769 = vsub.f32 %v1401, %v1768
    %1770 = vmatpush1.msra.mxu0 %v1769
    %1771 = vmatprep.subr.mxu0 0.0
    %v1772 = vand.u32 %v1400, 4294901760
    %v1773 = vsub.f32 %v1400, %v1772
    %1774 = vmatpush1.msra.mxu0 %v1773
    %1775 = vmatprep.subr.mxu0 0.0
    %v1776 = vand.u32 %v1399, 4294901760
    %v1777 = vsub.f32 %v1399, %v1776
    %1778 = vmatpush1.msra.mxu0 %v1777
    %1779 = vmatprep.subr.mxu0 0.0
    %v1780 = vand.u32 %v1398, 4294901760
    %v1781 = vsub.f32 %v1398, %v1780
    %1782 = vmatpush1.msra.mxu0 %v1781
    %1783 = vmatprep.subr.mxu0 0.0
    %v1784 = vand.u32 %v1397, 4294901760
    %v1785 = vsub.f32 %v1397, %v1784
    %1786 = vmatpush1.msra.mxu0 %v1785
    %1787 = vmatprep.subr.mxu0 0.0
    %v1788 = vand.u32 %v1396, 4294901760
    %v1789 = vsub.f32 %v1396, %v1788
    %1790 = vmatpush1.msra.mxu0 %v1789
    %1791 = vmatprep.subr.mxu0 0.0
    %v1792 = vand.u32 %v1395, 4294901760
    %v1793 = vsub.f32 %v1395, %v1792
    %1794 = vmatpush1.msra.mxu0 %v1793
    %1795 = vmatprep.subr.mxu0 0.0
    %v1796 = vand.u32 %v1394, 4294901760
    %v1797 = vsub.f32 %v1394, %v1796
    %1798 = vmatpush1.msra.mxu0 %v1797
    %1799 = vmatprep.subr.mxu0 0.0
    %v1800 = vand.u32 %v1393, 4294901760
    %v1801 = vsub.f32 %v1393, %v1800
    %1802 = vmatpush1.msra.mxu0 %v1801
    %1803 = vmatprep.subr.mxu0 0.0
    %v1804 = vand.u32 %v1392, 4294901760
    %v1805 = vsub.f32 %v1392, %v1804
    %1806 = vmatpush1.msra.mxu0 %v1805
    %1807 = vmatprep.subr.mxu0 0.0
    %v1808 = vand.u32 %v1391, 4294901760
    %v1809 = vsub.f32 %v1391, %v1808
    %1810 = vmatpush1.msra.mxu0 %v1809
    %1811 = vmatprep.subr.mxu0 0.0
    %v1812 = vand.u32 %v1390, 4294901760
    %v1813 = vsub.f32 %v1390, %v1812
    %1814 = vmatpush1.msra.mxu0 %v1813
    %1815 = vmatprep.subr.mxu0 0.0
    %v1816 = vand.u32 %v1389, 4294901760
    %v1817 = vsub.f32 %v1389, %v1816
    %1818 = vmatpush1.msra.mxu0 %v1817
    %1819 = vmatprep.subr.mxu0 0.0
    %v1820 = vand.u32 %v1388, 4294901760
    %v1821 = vsub.f32 %v1388, %v1820
    %1822 = vmatpush1.msra.mxu0 %v1821
    %1823 = vmatprep.subr.mxu0 0.0
    %v1824 = vand.u32 %v1387, 4294901760
    %v1825 = vsub.f32 %v1387, %v1824
    %1826 = vmatpush1.msra.mxu0 %v1825
    %1827 = vmatprep.subr.mxu0 0.0
    %v1828 = vand.u32 %v1418, 4294901760
    %v1829 = vsub.f32 %v1418, %v1828
    %1830 = vmatpush2.msra.mxu0 %v1829
    %1831 = vmatprep.subr.mxu0 0.0
    %v1832 = vand.u32 %v1417, 4294901760
    %v1833 = vsub.f32 %v1417, %v1832
    %1834 = vmatpush2.msra.mxu0 %v1833
    %1835 = vmatprep.subr.mxu0 0.0
    %v1836 = vand.u32 %v1416, 4294901760
    %v1837 = vsub.f32 %v1416, %v1836
    %1838 = vmatpush2.msra.mxu0 %v1837
    %1839 = vmatprep.subr.mxu0 0.0
    %v1840 = vand.u32 %v1415, 4294901760
    %v1841 = vsub.f32 %v1415, %v1840
    %1842 = vmatpush2.msra.mxu0 %v1841
    %1843 = vmatprep.subr.mxu0 0.0
    %v1844 = vand.u32 %v1414, 4294901760
    %v1845 = vsub.f32 %v1414, %v1844
    %1846 = vmatpush2.msra.mxu0 %v1845
    %1847 = vmatprep.subr.mxu0 0.0
    %v1848 = vand.u32 %v1413, 4294901760
    %v1849 = vsub.f32 %v1413, %v1848
    %1850 = vmatpush2.msra.mxu0 %v1849
    %1851 = vmatprep.subr.mxu0 0.0
    %v1852 = vand.u32 %v1412, 4294901760
    %v1853 = vsub.f32 %v1412, %v1852
    %1854 = vmatpush2.msra.mxu0 %v1853
    %1855 = vmatprep.subr.mxu0 0.0
    %v1856 = vand.u32 %v1411, 4294901760
    %v1857 = vsub.f32 %v1411, %v1856
    %1858 = vmatpush2.msra.mxu0 %v1857
    %1859 = vmatprep.subr.mxu0 0.0
    %v1860 = vand.u32 %v1410, 4294901760
    %v1861 = vsub.f32 %v1410, %v1860
    %1862 = vmatpush2.msra.mxu0 %v1861
    %1863 = vmatprep.subr.mxu0 0.0
    %v1864 = vand.u32 %v1409, 4294901760
    %v1865 = vsub.f32 %v1409, %v1864
    %1866 = vmatpush2.msra.mxu0 %v1865
    %1867 = vmatprep.subr.mxu0 0.0
    %v1868 = vand.u32 %v1408, 4294901760
    %v1869 = vsub.f32 %v1408, %v1868
    %1870 = vmatpush2.msra.mxu0 %v1869
    %1871 = vmatprep.subr.mxu0 0.0
    %v1872 = vand.u32 %v1407, 4294901760
    %v1873 = vsub.f32 %v1407, %v1872
    %1874 = vmatpush2.msra.mxu0 %v1873
    %1875 = vmatprep.subr.mxu0 0.0
    %v1876 = vand.u32 %v1406, 4294901760
    %v1877 = vsub.f32 %v1406, %v1876
    %1878 = vmatpush2.msra.mxu0 %v1877
    %1879 = vmatprep.subr.mxu0 0.0
    %v1880 = vand.u32 %v1405, 4294901760
    %v1881 = vsub.f32 %v1405, %v1880
    %1882 = vmatpush2.msra.mxu0 %v1881
    %1883 = vmatprep.subr.mxu0 0.0
    %v1884 = vand.u32 %v1404, 4294901760
    %v1885 = vsub.f32 %v1404, %v1884
    %1886 = vmatpush2.msra.mxu0 %v1885
    %1887 = vmatprep.subr.mxu0 0.0
    %v1888 = vand.u32 %v1403, 4294901760
    %v1889 = vsub.f32 %v1403, %v1888
    %1890 = vmatpush2.msra.mxu0 %v1889
    %v1891 = vand.u32 %v1386, 4294901760
    %v1892 = vsub.f32 %v1386, %v1891
    %1893 = vmatprep.mubr.f32.mxu0 %v1892
    %v1894 = vand.u32 %v1385, 4294901760
    %v1895 = vsub.f32 %v1385, %v1894
    %1896 = vmatmul.mubr.f32.gmra.mxu0 %v1895
    %v1897 = vpop.f32.mrf.mxu0
    %v1898 = vadd.f32 %v1760, %v1897
    %v1899 = vpop.f32.mrf.mxu0
    %1900 = vdwg.mxu0
    %1901 = vmatprep.subr.mxu0 0.0
    %v1902 = vand.u32 %v1402, 4294901760
    %1903 = vmatpush1.msra.mxu0 %v1902
    %1904 = vmatprep.subr.mxu0 0.0
    %v1905 = vand.u32 %v1401, 4294901760
    %1906 = vmatpush1.msra.mxu0 %v1905
    %1907 = vmatprep.subr.mxu0 0.0
    %v1908 = vand.u32 %v1400, 4294901760
    %1909 = vmatpush1.msra.mxu0 %v1908
    %1910 = vmatprep.subr.mxu0 0.0
    %v1911 = vand.u32 %v1399, 4294901760
    %1912 = vmatpush1.msra.mxu0 %v1911
    %1913 = vmatprep.subr.mxu0 0.0
    %v1914 = vand.u32 %v1398, 4294901760
    %1915 = vmatpush1.msra.mxu0 %v1914
    %1916 = vmatprep.subr.mxu0 0.0
    %v1917 = vand.u32 %v1397, 4294901760
    %1918 = vmatpush1.msra.mxu0 %v1917
    %1919 = vmatprep.subr.mxu0 0.0
    %v1920 = vand.u32 %v1396, 4294901760
    %1921 = vmatpush1.msra.mxu0 %v1920
    %1922 = vmatprep.subr.mxu0 0.0
    %v1923 = vand.u32 %v1395, 4294901760
    %1924 = vmatpush1.msra.mxu0 %v1923
    %1925 = vmatprep.subr.mxu0 0.0
    %v1926 = vand.u32 %v1394, 4294901760
    %1927 = vmatpush1.msra.mxu0 %v1926
    %1928 = vmatprep.subr.mxu0 0.0
    %v1929 = vand.u32 %v1393, 4294901760
    %1930 = vmatpush1.msra.mxu0 %v1929
    %1931 = vmatprep.subr.mxu0 0.0
    %v1932 = vand.u32 %v1392, 4294901760
    %1933 = vmatpush1.msra.mxu0 %v1932
    %1934 = vmatprep.subr.mxu0 0.0
    %v1935 = vand.u32 %v1391, 4294901760
    %1936 = vmatpush1.msra.mxu0 %v1935
    %1937 = vmatprep.subr.mxu0 0.0
    %v1938 = vand.u32 %v1390, 4294901760
    %1939 = vmatpush1.msra.mxu0 %v1938
    %1940 = vmatprep.subr.mxu0 0.0
    %v1941 = vand.u32 %v1389, 4294901760
    %1942 = vmatpush1.msra.mxu0 %v1941
    %1943 = vmatprep.subr.mxu0 0.0
    %v1944 = vand.u32 %v1388, 4294901760
    %1945 = vmatpush1.msra.mxu0 %v1944
    %1946 = vmatprep.subr.mxu0 0.0
    %v1947 = vand.u32 %v1387, 4294901760
    %1948 = vmatpush1.msra.mxu0 %v1947
    %1949 = vmatprep.subr.mxu0 0.0
    %v1950 = vand.u32 %v1418, 4294901760
    %1951 = vmatpush2.msra.mxu0 %v1950
    %1952 = vmatprep.subr.mxu0 0.0
    %v1953 = vand.u32 %v1417, 4294901760
    %1954 = vmatpush2.msra.mxu0 %v1953
    %1955 = vmatprep.subr.mxu0 0.0
    %v1956 = vand.u32 %v1416, 4294901760
    %1957 = vmatpush2.msra.mxu0 %v1956
    %1958 = vmatprep.subr.mxu0 0.0
    %v1959 = vand.u32 %v1415, 4294901760
    %1960 = vmatpush2.msra.mxu0 %v1959
    %1961 = vmatprep.subr.mxu0 0.0
    %v1962 = vand.u32 %v1414, 4294901760
    %1963 = vmatpush2.msra.mxu0 %v1962
    %1964 = vmatprep.subr.mxu0 0.0
    %v1965 = vand.u32 %v1413, 4294901760
    %1966 = vmatpush2.msra.mxu0 %v1965
    %1967 = vmatprep.subr.mxu0 0.0
    %v1968 = vand.u32 %v1412, 4294901760
    %1969 = vmatpush2.msra.mxu0 %v1968
    %1970 = vmatprep.subr.mxu0 0.0
    %v1971 = vand.u32 %v1411, 4294901760
    %1972 = vmatpush2.msra.mxu0 %v1971
    %1973 = vmatprep.subr.mxu0 0.0
    %v1974 = vand.u32 %v1410, 4294901760
    %1975 = vmatpush2.msra.mxu0 %v1974
    %1976 = vmatprep.subr.mxu0 0.0
    %v1977 = vand.u32 %v1409, 4294901760
    %1978 = vmatpush2.msra.mxu0 %v1977
    %1979 = vmatprep.subr.mxu0 0.0
    %v1980 = vand.u32 %v1408, 4294901760
    %1981 = vmatpush2.msra.mxu0 %v1980
    %1982 = vmatprep.subr.mxu0 0.0
    %v1983 = vand.u32 %v1407, 4294901760
    %1984 = vmatpush2.msra.mxu0 %v1983
    %1985 = vmatprep.subr.mxu0 0.0
    %v1986 = vand.u32 %v1406, 4294901760
    %1987 = vmatpush2.msra.mxu0 %v1986
    %1988 = vmatprep.subr.mxu0 0.0
    %v1989 = vand.u32 %v1405, 4294901760
    %1990 = vmatpush2.msra.mxu0 %v1989
    %1991 = vmatprep.subr.mxu0 0.0
    %v1992 = vand.u32 %v1404, 4294901760
    %1993 = vmatpush2.msra.mxu0 %v1992
    %1994 = vmatprep.subr.mxu0 0.0
    %v1995 = vand.u32 %v1403, 4294901760
    %1996 = vmatpush2.msra.mxu0 %v1995
    %v1997 = vand.u32 %v1386, 4294901760
    %v1998 = vsub.f32 %v1386, %v1997
    %v1999 = vand.u32 %v1998, 4294901760
    %2000 = vmatprep.mubr.f32.mxu0 %v1999
    %v2001 = vand.u32 %v1385, 4294901760
    %v2002 = vsub.f32 %v1385, %v2001
    %v2003 = vand.u32 %v2002, 4294901760
    %2004 = vmatmul.mubr.f32.gmra.mxu0 %v2003
    %v2005 = vpop.f32.mrf.mxu0
    %v2006 = vadd.f32 %v1898, %v2005
    %v2007 = vpop.f32.mrf.mxu0
    %2008 = vdwg.mxu0
    %2009 = vmatprep.subr.mxu0 0.0
    %v2010 = vand.u32 %v1402, 4294901760
    %v2011 = vsub.f32 %v1402, %v2010
    %v2012 = vand.u32 %v2011, 4294901760
    %2013 = vmatpush1.msra.mxu0 %v2012
    %2014 = vmatprep.subr.mxu0 0.0
    %v2015 = vand.u32 %v1401, 4294901760
    %v2016 = vsub.f32 %v1401, %v2015
    %v2017 = vand.u32 %v2016, 4294901760
    %2018 = vmatpush1.msra.mxu0 %v2017
    %2019 = vmatprep.subr.mxu0 0.0
    %v2020 = vand.u32 %v1400, 4294901760
    %v2021 = vsub.f32 %v1400, %v2020
    %v2022 = vand.u32 %v2021, 4294901760
    %2023 = vmatpush1.msra.mxu0 %v2022
    %2024 = vmatprep.subr.mxu0 0.0
    %v2025 = vand.u32 %v1399, 4294901760
    %v2026 = vsub.f32 %v1399, %v2025
    %v2027 = vand.u32 %v2026, 4294901760
    %2028 = vmatpush1.msra.mxu0 %v2027
    %2029 = vmatprep.subr.mxu0 0.0
    %v2030 = vand.u32 %v1398, 4294901760
    %v2031 = vsub.f32 %v1398, %v2030
    %v2032 = vand.u32 %v2031, 4294901760
    %2033 = vmatpush1.msra.mxu0 %v2032
    %2034 = vmatprep.subr.mxu0 0.0
    %v2035 = vand.u32 %v1397, 4294901760
    %v2036 = vsub.f32 %v1397, %v2035
    %v2037 = vand.u32 %v2036, 4294901760
    %2038 = vmatpush1.msra.mxu0 %v2037
    %2039 = vmatprep.subr.mxu0 0.0
    %v2040 = vand.u32 %v1396, 4294901760
    %v2041 = vsub.f32 %v1396, %v2040
    %v2042 = vand.u32 %v2041, 4294901760
    %2043 = vmatpush1.msra.mxu0 %v2042
    %2044 = vmatprep.subr.mxu0 0.0
    %v2045 = vand.u32 %v1395, 4294901760
    %v2046 = vsub.f32 %v1395, %v2045
    %v2047 = vand.u32 %v2046, 4294901760
    %2048 = vmatpush1.msra.mxu0 %v2047
    %2049 = vmatprep.subr.mxu0 0.0
    %v2050 = vand.u32 %v1394, 4294901760
    %v2051 = vsub.f32 %v1394, %v2050
    %v2052 = vand.u32 %v2051, 4294901760
    %2053 = vmatpush1.msra.mxu0 %v2052
    %2054 = vmatprep.subr.mxu0 0.0
    %v2055 = vand.u32 %v1393, 4294901760
    %v2056 = vsub.f32 %v1393, %v2055
    %v2057 = vand.u32 %v2056, 4294901760
    %2058 = vmatpush1.msra.mxu0 %v2057
    %2059 = vmatprep.subr.mxu0 0.0
    %v2060 = vand.u32 %v1392, 4294901760
    %v2061 = vsub.f32 %v1392, %v2060
    %v2062 = vand.u32 %v2061, 4294901760
    %2063 = vmatpush1.msra.mxu0 %v2062
    %2064 = vmatprep.subr.mxu0 0.0
    %v2065 = vand.u32 %v1391, 4294901760
    %v2066 = vsub.f32 %v1391, %v2065
    %v2067 = vand.u32 %v2066, 4294901760
    %2068 = vmatpush1.msra.mxu0 %v2067
    %2069 = vmatprep.subr.mxu0 0.0
    %v2070 = vand.u32 %v1390, 4294901760
    %v2071 = vsub.f32 %v1390, %v2070
    %v2072 = vand.u32 %v2071, 4294901760
    %2073 = vmatpush1.msra.mxu0 %v2072
    %2074 = vmatprep.subr.mxu0 0.0
    %v2075 = vand.u32 %v1389, 4294901760
    %v2076 = vsub.f32 %v1389, %v2075
    %v2077 = vand.u32 %v2076, 4294901760
    %2078 = vmatpush1.msra.mxu0 %v2077
    %2079 = vmatprep.subr.mxu0 0.0
    %v2080 = vand.u32 %v1388, 4294901760
    %v2081 = vsub.f32 %v1388, %v2080
    %v2082 = vand.u32 %v2081, 4294901760
    %2083 = vmatpush1.msra.mxu0 %v2082
    %2084 = vmatprep.subr.mxu0 0.0
    %v2085 = vand.u32 %v1387, 4294901760
    %v2086 = vsub.f32 %v1387, %v2085
    %v2087 = vand.u32 %v2086, 4294901760
    %2088 = vmatpush1.msra.mxu0 %v2087
    %2089 = vmatprep.subr.mxu0 0.0
    %v2090 = vand.u32 %v1418, 4294901760
    %v2091 = vsub.f32 %v1418, %v2090
    %v2092 = vand.u32 %v2091, 4294901760
    %2093 = vmatpush2.msra.mxu0 %v2092
    %2094 = vmatprep.subr.mxu0 0.0
    %v2095 = vand.u32 %v1417, 4294901760
    %v2096 = vsub.f32 %v1417, %v2095
    %v2097 = vand.u32 %v2096, 4294901760
    %2098 = vmatpush2.msra.mxu0 %v2097
    %2099 = vmatprep.subr.mxu0 0.0
    %v2100 = vand.u32 %v1416, 4294901760
    %v2101 = vsub.f32 %v1416, %v2100
    %v2102 = vand.u32 %v2101, 4294901760
    %2103 = vmatpush2.msra.mxu0 %v2102
    %2104 = vmatprep.subr.mxu0 0.0
    %v2105 = vand.u32 %v1415, 4294901760
    %v2106 = vsub.f32 %v1415, %v2105
    %v2107 = vand.u32 %v2106, 4294901760
    %2108 = vmatpush2.msra.mxu0 %v2107
    %2109 = vmatprep.subr.mxu0 0.0
    %v2110 = vand.u32 %v1414, 4294901760
    %v2111 = vsub.f32 %v1414, %v2110
    %v2112 = vand.u32 %v2111, 4294901760
    %2113 = vmatpush2.msra.mxu0 %v2112
    %2114 = vmatprep.subr.mxu0 0.0
    %v2115 = vand.u32 %v1413, 4294901760
    %v2116 = vsub.f32 %v1413, %v2115
    %v2117 = vand.u32 %v2116, 4294901760
    %2118 = vmatpush2.msra.mxu0 %v2117
    %2119 = vmatprep.subr.mxu0 0.0
    %v2120 = vand.u32 %v1412, 4294901760
    %v2121 = vsub.f32 %v1412, %v2120
    %v2122 = vand.u32 %v2121, 4294901760
    %2123 = vmatpush2.msra.mxu0 %v2122
    %2124 = vmatprep.subr.mxu0 0.0
    %v2125 = vand.u32 %v1411, 4294901760
    %v2126 = vsub.f32 %v1411, %v2125
    %v2127 = vand.u32 %v2126, 4294901760
    %2128 = vmatpush2.msra.mxu0 %v2127
    %2129 = vmatprep.subr.mxu0 0.0
    %v2130 = vand.u32 %v1410, 4294901760
    %v2131 = vsub.f32 %v1410, %v2130
    %v2132 = vand.u32 %v2131, 4294901760
    %2133 = vmatpush2.msra.mxu0 %v2132
    %2134 = vmatprep.subr.mxu0 0.0
    %v2135 = vand.u32 %v1409, 4294901760
    %v2136 = vsub.f32 %v1409, %v2135
    %v2137 = vand.u32 %v2136, 4294901760
    %2138 = vmatpush2.msra.mxu0 %v2137
    %2139 = vmatprep.subr.mxu0 0.0
    %v2140 = vand.u32 %v1408, 4294901760
    %v2141 = vsub.f32 %v1408, %v2140
    %v2142 = vand.u32 %v2141, 4294901760
    %2143 = vmatpush2.msra.mxu0 %v2142
    %2144 = vmatprep.subr.mxu0 0.0
    %v2145 = vand.u32 %v1407, 4294901760
    %v2146 = vsub.f32 %v1407, %v2145
    %v2147 = vand.u32 %v2146, 4294901760
    %2148 = vmatpush2.msra.mxu0 %v2147
    %2149 = vmatprep.subr.mxu0 0.0
    %v2150 = vand.u32 %v1406, 4294901760
    %v2151 = vsub.f32 %v1406, %v2150
    %v2152 = vand.u32 %v2151, 4294901760
    %2153 = vmatpush2.msra.mxu0 %v2152
    %2154 = vmatprep.subr.mxu0 0.0
    %v2155 = vand.u32 %v1405, 4294901760
    %v2156 = vsub.f32 %v1405, %v2155
    %v2157 = vand.u32 %v2156, 4294901760
    %2158 = vmatpush2.msra.mxu0 %v2157
    %2159 = vmatprep.subr.mxu0 0.0
    %v2160 = vand.u32 %v1404, 4294901760
    %v2161 = vsub.f32 %v1404, %v2160
    %v2162 = vand.u32 %v2161, 4294901760
    %2163 = vmatpush2.msra.mxu0 %v2162
    %2164 = vmatprep.subr.mxu0 0.0
    %v2165 = vand.u32 %v1403, 4294901760
    %v2166 = vsub.f32 %v1403, %v2165
    %v2167 = vand.u32 %v2166, 4294901760
    %2168 = vmatpush2.msra.mxu0 %v2167
    %v2169 = vand.u32 %v1386, 4294901760
    %2170 = vmatprep.mubr.f32.mxu0 %v2169
    %v2171 = vand.u32 %v1385, 4294901760
    %2172 = vmatmul.mubr.f32.gmra.mxu0 %v2171
    %v2173 = vpop.f32.mrf.mxu0
    %v2174 = vadd.f32 %v2006, %v2173
    %v2175 = vpop.f32.mrf.mxu0
    %2176 = vdwg.mxu0
    %2177 = vmatprep.subr.mxu0 0.0
    %v2178 = vand.u32 %v1402, 4294901760
    %2179 = vmatpush1.msra.mxu0 %v2178
    %2180 = vmatprep.subr.mxu0 0.0
    %v2181 = vand.u32 %v1401, 4294901760
    %2182 = vmatpush1.msra.mxu0 %v2181
    %2183 = vmatprep.subr.mxu0 0.0
    %v2184 = vand.u32 %v1400, 4294901760
    %2185 = vmatpush1.msra.mxu0 %v2184
    %2186 = vmatprep.subr.mxu0 0.0
    %v2187 = vand.u32 %v1399, 4294901760
    %2188 = vmatpush1.msra.mxu0 %v2187
    %2189 = vmatprep.subr.mxu0 0.0
    %v2190 = vand.u32 %v1398, 4294901760
    %2191 = vmatpush1.msra.mxu0 %v2190
    %2192 = vmatprep.subr.mxu0 0.0
    %v2193 = vand.u32 %v1397, 4294901760
    %2194 = vmatpush1.msra.mxu0 %v2193
    %2195 = vmatprep.subr.mxu0 0.0
    %v2196 = vand.u32 %v1396, 4294901760
    %2197 = vmatpush1.msra.mxu0 %v2196
    %2198 = vmatprep.subr.mxu0 0.0
    %v2199 = vand.u32 %v1395, 4294901760
    %2200 = vmatpush1.msra.mxu0 %v2199
    %2201 = vmatprep.subr.mxu0 0.0
    %v2202 = vand.u32 %v1394, 4294901760
    %2203 = vmatpush1.msra.mxu0 %v2202
    %2204 = vmatprep.subr.mxu0 0.0
    %v2205 = vand.u32 %v1393, 4294901760
    %2206 = vmatpush1.msra.mxu0 %v2205
    %2207 = vmatprep.subr.mxu0 0.0
    %v2208 = vand.u32 %v1392, 4294901760
    %2209 = vmatpush1.msra.mxu0 %v2208
    %2210 = vmatprep.subr.mxu0 0.0
    %v2211 = vand.u32 %v1391, 4294901760
    %2212 = vmatpush1.msra.mxu0 %v2211
    %2213 = vmatprep.subr.mxu0 0.0
    %v2214 = vand.u32 %v1390, 4294901760
    %2215 = vmatpush1.msra.mxu0 %v2214
    %2216 = vmatprep.subr.mxu0 0.0
    %v2217 = vand.u32 %v1389, 4294901760
    %2218 = vmatpush1.msra.mxu0 %v2217
    %2219 = vmatprep.subr.mxu0 0.0
    %v2220 = vand.u32 %v1388, 4294901760
    %2221 = vmatpush1.msra.mxu0 %v2220
    %2222 = vmatprep.subr.mxu0 0.0
    %v2223 = vand.u32 %v1387, 4294901760
    %2224 = vmatpush1.msra.mxu0 %v2223
    %2225 = vmatprep.subr.mxu0 0.0
    %v2226 = vand.u32 %v1418, 4294901760
    %2227 = vmatpush2.msra.mxu0 %v2226
    %2228 = vmatprep.subr.mxu0 0.0
    %v2229 = vand.u32 %v1417, 4294901760
    %2230 = vmatpush2.msra.mxu0 %v2229
    %2231 = vmatprep.subr.mxu0 0.0
    %v2232 = vand.u32 %v1416, 4294901760
    %2233 = vmatpush2.msra.mxu0 %v2232
    %2234 = vmatprep.subr.mxu0 0.0
    %v2235 = vand.u32 %v1415, 4294901760
    %2236 = vmatpush2.msra.mxu0 %v2235
    %2237 = vmatprep.subr.mxu0 0.0
    %v2238 = vand.u32 %v1414, 4294901760
    %2239 = vmatpush2.msra.mxu0 %v2238
    %2240 = vmatprep.subr.mxu0 0.0
    %v2241 = vand.u32 %v1413, 4294901760
    %2242 = vmatpush2.msra.mxu0 %v2241
    %2243 = vmatprep.subr.mxu0 0.0
    %v2244 = vand.u32 %v1412, 4294901760
    %2245 = vmatpush2.msra.mxu0 %v2244
    %2246 = vmatprep.subr.mxu0 0.0
    %v2247 = vand.u32 %v1411, 4294901760
    %2248 = vmatpush2.msra.mxu0 %v2247
    %2249 = vmatprep.subr.mxu0 0.0
    %v2250 = vand.u32 %v1410, 4294901760
    %2251 = vmatpush2.msra.mxu0 %v2250
    %2252 = vmatprep.subr.mxu0 0.0
    %v2253 = vand.u32 %v1409, 4294901760
    %2254 = vmatpush2.msra.mxu0 %v2253
    %2255 = vmatprep.subr.mxu0 0.0
    %v2256 = vand.u32 %v1408, 4294901760
    %2257 = vmatpush2.msra.mxu0 %v2256
    %2258 = vmatprep.subr.mxu0 0.0
    %v2259 = vand.u32 %v1407, 4294901760
    %2260 = vmatpush2.msra.mxu0 %v2259
    %2261 = vmatprep.subr.mxu0 0.0
    %v2262 = vand.u32 %v1406, 4294901760
    %2263 = vmatpush2.msra.mxu0 %v2262
    %2264 = vmatprep.subr.mxu0 0.0
    %v2265 = vand.u32 %v1405, 4294901760
    %2266 = vmatpush2.msra.mxu0 %v2265
    %2267 = vmatprep.subr.mxu0 0.0
    %v2268 = vand.u32 %v1404, 4294901760
    %2269 = vmatpush2.msra.mxu0 %v2268
    %2270 = vmatprep.subr.mxu0 0.0
    %v2271 = vand.u32 %v1403, 4294901760
    %2272 = vmatpush2.msra.mxu0 %v2271
    %v2273 = vand.u32 %v1386, 4294901760
    %2274 = vmatprep.mubr.f32.mxu0 %v2273
    %v2275 = vand.u32 %v1385, 4294901760
    %2276 = vmatmul.mubr.f32.gmra.mxu0 %v2275
    %v2277 = vpop.f32.mrf.mxu0
    %v2278 = vadd.f32 %v2174, %v2277
    %v2279 = vpop.f32.mrf.mxu0
    %2280 = vdwg.mxu0
    %vm2281 = vcmask 261120
    %2282 = vst.msk [vmem:[#allocation6] sm:$0xff] %vm2281, %v2278
    // Predicated region
    $region22: #{tpu_custom_call.1} parent=1 // pred_check
      _
    $region23: #{tpu_custom_call.1} parent=1 // pred_check_branch
      %2284 = sbr.rel (0) target = $region25
    $region24: #{tpu_custom_call.1} parent=1 // pred_region
      %s2286 = ssub.s32 128, 128
      %2287 = vsyncadd [#allocation5], %s2286
      %s2289 = sshll.u32 [#allocation6], 4
      %s2290 = int_to_ptr.vmem [resolvable:$true] %s2289
      %2292 = dma.vmem_to_hbm [thread:$0]  %s2290, 128, %s4, [#allocation5]
    $region25: #{tpu_custom_call.1} parent=1 // pred_fallthru
      _
    // Predicated region
    $region26: #{tpu_custom_call.1} parent=1 // pred_check
      _
    $region27: #{tpu_custom_call.1} parent=1 // pred_check_branch
      %2294 = sbr.rel (0) target = $region29
    $region28: #{tpu_custom_call.1} parent=1 // pred_region
      %2295 = dma.done [#allocation5], 128
    $region29: #{tpu_custom_call.1} parent=1 // pred_fallthru
      _
    %2296 = vsyncpa [#allocation4], 1
    %2297 = vsyncpa [#allocation5], 1

</llo_original>
